<compile_context>
chip_gen: v5e
topology: v5e:2x2
jax: 0.10.0
libtpu: 0.0.40
codegen_flags: <defaults>
</compile_context>

<pallas_src>
import jax
import jax.numpy as jnp
from jax import lax
from jax.experimental import pallas as pl
from jax.experimental.pallas import tpu as pltpu

EMBED = 23   # CNN(num_channels, 23) in DingoNet.__init__
KSIZE = 15   # all Conv1d layers use kernel_size=15


def _rup(x, m):
    return ((x + m - 1) // m) * m


# ------------------------------ fused kernel ----------------------------------
def make_dingo_kernel(*, B, BL, N, head, S, P, E_PAD, V_PAD, CP1, CP,
                      R_W1, R_W2, R_W3, R_W4, R_EMB, R_WA, R_PB):
    """All sizes / row offsets are static Python ints (closed over)."""
    NEG = -1e30

    def conv_layer(slab_ref, x_val, cin, r_w, cout):
        # x_val: (cin, BL) channels-first, both batches side by side on lanes.
        # Zero-pad 128 extra lanes so every shifted window is full width
        # (unmasked); wrapped/junk lanes only ever feed junk output columns.
        xw = jnp.concatenate(
            [x_val, jnp.zeros((cin, 128), jnp.float32)], axis=1)
        taps = max(1, 128 // cin)                 # <=128 contraction rows / dot
        acc = None
        for k0 in range(0, KSIZE, taps):
            kk = range(k0, min(k0 + taps, KSIZE))
            parts = [xw[:, k:k + BL] for k in kk]           # full-width windows
            rhs = parts[0] if len(parts) == 1 else jnp.concatenate(parts, axis=0)
            wch = slab_ref[r_w:r_w + cout, k0 * cin:(k0 + len(parts)) * cin]
            d = jnp.dot(wch, rhs, preferred_element_type=jnp.float32)
            acc = d if acc is None else acc + d
        bcol = slab_ref[r_w:r_w + cout, KSIZE * cin:KSIZE * cin + 1]
        return jnp.maximum(acc + bcol, 0.0)                 # (cout, BL)

    def kernel(ids_ref, slab_ref, o_ref):
        # ---- embedding lookup fused as a one-hot MXU matmul ----
        embT = slab_ref[R_EMB:R_EMB + E_PAD, 0:V_PAD]       # (E_PAD, V_PAD)
        ids = ids_ref[...]                                  # (1, BL) int32
        viota = lax.broadcasted_iota(jnp.int32, (V_PAD, BL), 0)
        onehot = (viota == ids).astype(jnp.float32)         # (V_PAD, BL)
        x = jnp.dot(embT, onehot, preferred_element_type=jnp.float32)  # (E_PAD, BL)

        # ---- CNN: 4 x (valid Conv1d + bias + ReLU), batch folded on lanes ----
        h = conv_layer(slab_ref, x, E_PAD, R_W1, CP1)
        h = conv_layer(slab_ref, h, CP1, R_W2, CP)
        h = conv_layer(slab_ref, h, CP, R_W3, CP)
        h = conv_layer(slab_ref, h, CP, R_W4, CP)           # (CP, BL)

        # ---- section view H[c*S+s, n] = h[c, head + s*N + n] via selection matmul ----
        hw = jnp.concatenate([h, jnp.zeros((CP, 128), jnp.float32)], axis=1)
        parts = [hw[:, head + s * N: head + s * N + BL] for s in range(S)]
        stacked = parts[0] if len(parts) == 1 else jnp.concatenate(parts, axis=0)
        pbig = slab_ref[R_PB:R_PB + P, 0:S * CP]            # (P, S*CP) 0/1 matrix
        hb = jnp.dot(pbig, stacked, preferred_element_type=jnp.float32)  # (P, BL)
        # hb[:, b*128 + n] == H_b[:, n] for n < N; other lanes are finite junk.

        # ---- self-attention pooling, both batches in one pass ----
        wa = slab_ref[R_WA:R_WA + P, 0:P]                   # (P, P)
        va = slab_ref[R_WA:R_WA + P, P:P + 1]               # (P, 1)
        t = jnp.tanh(jnp.dot(wa, hb, preferred_element_type=jnp.float32))
        e = jnp.sum(va * t, axis=0, keepdims=True)          # (1, BL)  VPU + XLU

        # masked per-batch-block softmax (junk lanes get exactly 0 weight)
        lane = lax.broadcasted_iota(jnp.int32, (B, BL), 1)
        blk0 = lax.broadcasted_iota(jnp.int32, (B, BL), 0) * 128
        valid = (lane >= blk0) & (lane < blk0 + N)
        e2 = jnp.where(valid, jnp.broadcast_to(e, (B, BL)), NEG)
        m = jnp.max(e2, axis=-1, keepdims=True)
        pexp = jnp.exp(e2 - m)
        attn = pexp / jnp.sum(pexp, axis=-1, keepdims=True)  # (B, BL)

        # context[b, p] = sum_n attn_b[n] * H_b[p, n]  (one matmul, both batches)
        ctx = lax.dot_general(attn, hb, (((1,), (1,)), ((), ())),
                              preferred_element_type=jnp.float32)  # (B, P)
        o_ref[...] = ctx

    return kernel


# --------------------------------- wrapper ------------------------------------
def _pack_conv(w, b, cin_pad, cout_pad):
    """(K, C_in, C_out), (1, C_out) -> (cout_pad, K*cin_pad + 1) with bias col."""
    k, cin, cout = w.shape
    wp = jnp.zeros((k, cin_pad, cout_pad), jnp.float32)
    wp = wp.at[:, :cin, :cout].set(w.astype(jnp.float32))
    wmat = jnp.transpose(wp.reshape(k * cin_pad, cout_pad))   # (cout_pad, K*cin_pad)
    bcol = jnp.zeros((cout_pad, 1), jnp.float32).at[:cout, 0].set(
        b.reshape(-1).astype(jnp.float32))
    return jnp.concatenate([wmat, bcol], axis=1)


def dingo_forward(input_seq, params, num_channels, prot_section_size):
    emb, w1, b1, w2, b2, w3, b3, w4, b4, wa, va = params
    B, L = input_seq.shape
    C = num_channels
    S = prot_section_size
    E = emb.shape[1]
    V = emb.shape[0]
    P = C * S

    PL = L - 4 * (KSIZE - 1)          # length after 4 valid convs
    assert L <= 128, "per-batch sequence must fit one 128-lane block"
    assert PL >= S >= 1
    N = PL // S
    rem = PL % S
    head = rem // 2

    BL = B * 128
    E_PAD = _rup(E, 8)
    V_PAD = _rup(V + 1, 8)            # room for the out-of-vocab pad id
    CP1 = _rup(2 * C, 8)              # layer-1 out channels (padded)
    CP = _rup(C, 8)                   # layer 2-4 out channels (padded)
    P8 = _rup(P, 8)

    W_SLAB = _rup(max(KSIZE * E_PAD + 1, KSIZE * CP1 + 1, KSIZE * CP + 1,
                      V_PAD, P + 1, S * CP), 128)

    # packed-slab row offsets (all 8-aligned)
    R_W1 = 0
    R_W2 = R_W1 + CP1
    R_W3 = R_W2 + CP
    R_W4 = R_W3 + CP
    R_EMB = R_W4 + CP
    R_WA = R_EMB + E_PAD
    R_PB = R_WA + P8
    R_TOT = R_PB + P8

    slab = jnp.zeros((R_TOT, W_SLAB), jnp.float32)

    def put(s, r0, piece):
        return s.at[r0:r0 + piece.shape[0], :piece.shape[1]].set(piece)

    slab = put(slab, R_W1, _pack_conv(w1, b1, E_PAD, CP1))
    slab = put(slab, R_W2, _pack_conv(w2, b2, CP1, CP))
    slab = put(slab, R_W3, _pack_conv(w3, b3, CP, CP))
    slab = put(slab, R_W4, _pack_conv(w4, b4, CP, CP))

    embT = jnp.zeros((E_PAD, V_PAD), jnp.float32).at[:E, :V].set(
        jnp.transpose(emb.astype(jnp.float32)))
    slab = put(slab, R_EMB, embT)

    wa_band = jnp.zeros((P8, P + 1), jnp.float32)
    wa_band = wa_band.at[:P, :P].set(wa.astype(jnp.float32))
    wa_band = wa_band.at[:P, P].set(va.reshape(-1).astype(jnp.float32))
    slab = put(slab, R_WA, wa_band)

    # selection matrix: pbig[c*S + s, s*CP + c] = 1  (rebuilds the section view)
    cc = jnp.arange(C)[:, None]
    ss = jnp.arange(S)[None, :]
    rows = (cc * S + ss).reshape(-1)
    cols = (ss * CP + cc).reshape(-1)
    pbig = jnp.zeros((P8, S * CP), jnp.float32).at[rows, cols].set(1.0)
    slab = put(slab, R_PB, pbig)

    # ids: pad each row to 128 lanes with an out-of-vocab id, fold batch on lanes
    ids = jnp.pad(input_seq.astype(jnp.int32), ((0, 0), (0, 128 - L)),
                  constant_values=V).reshape(1, BL)

    kernel = make_dingo_kernel(
        B=B, BL=BL, N=N, head=head, S=S, P=P, E_PAD=E_PAD, V_PAD=V_PAD,
        CP1=CP1, CP=CP, R_W1=R_W1, R_W2=R_W2, R_W3=R_W3, R_W4=R_W4,
        R_EMB=R_EMB, R_WA=R_WA, R_PB=R_PB)

    out = pl.pallas_call(
        kernel,
        out_shape=jax.ShapeDtypeStruct((B, P), jnp.float32),
        grid=(1,),
        in_specs=[pl.BlockSpec((1, BL), lambda i: (0, 0)),
                  pl.BlockSpec((R_TOT, W_SLAB), lambda i: (0, 0))],
        out_specs=pl.BlockSpec((B, P), lambda i: (0, 0)),
        compiler_params=pltpu.CompilerParams(
            dimension_semantics=("arbitrary",)),
    )(ids, slab)

    return out   # (B, C*S) == context_vec.squeeze(1)


# ------------------------------ params / reference ----------------------------
def init_params(key, num_channels, prot_section_size):
    C = num_channels
    P = C * prot_section_size
    ks = jax.random.split(key, 11)
    emb = jax.random.normal(ks[0], (26, EMBED), jnp.float32) * 0.5
    w1 = jax.random.normal(ks[1], (KSIZE, EMBED, 2 * C), jnp.float32) * 0.1
    b1 = jax.random.normal(ks[2], (1, 2 * C), jnp.float32) * 0.1
    w2 = jax.random.normal(ks[3], (KSIZE, 2 * C, C), jnp.float32) * 0.1
    b2 = jax.random.normal(ks[4], (1, C), jnp.float32) * 0.1
    w3 = jax.random.normal(ks[5], (KSIZE, C, C), jnp.float32) * 0.1
    b3 = jax.random.normal(ks[6], (1, C), jnp.float32) * 0.1
    w4 = jax.random.normal(ks[7], (KSIZE, C, C), jnp.float32) * 0.1
    b4 = jax.random.normal(ks[8], (1, C), jnp.float32) * 0.1
    wa = jax.random.normal(ks[9], (P, P), jnp.float32) * 0.1
    va = jax.random.normal(ks[10], (1, P), jnp.float32) * 0.1
    return (emb, w1, b1, w2, b2, w3, b3, w4, b4, wa, va)


def reference(input_seq, params, num_channels, prot_section_size):
    # pure-JAX reference mirroring the PyTorch forward (eval mode)
    emb, w1, b1, w2, b2, w3, b3, w4, b4, wa, va = params
    B, L = input_seq.shape
    C = num_channels
    S = prot_section_size
    x = jnp.take(emb, input_seq, axis=0)  # (B, L, E)

    def conv_relu(inp, w, b):
        l_out = inp.shape[1] - KSIZE + 1
        acc = jnp.zeros((inp.shape[0], l_out, w.shape[2]), jnp.float32) + b[None]
        for k in range(KSIZE):
            acc = acc + jnp.einsum('ble,eo->blo', inp[:, k:k + l_out, :], w[k])
        return jnp.maximum(acc, 0.0)

    h = conv_relu(x, w1, b1)
    h = conv_relu(h, w2, b2)
    h = conv_relu(h, w3, b3)
    h = conv_relu(h, w4, b4)              # (B, PL, C)
    PL = h.shape[1]
    N = PL // S
    rem = PL % S
    head = rem // 2
    tail = PL - (rem - head)
    H = jnp.transpose(h, (0, 2, 1))[:, :, head:tail].reshape(B, C * S, N)
    t = jnp.tanh(jnp.einsum('pq,bqn->bpn', wa, H))
    e = jnp.einsum('op,bpn->bon', va, t)
    a = jax.nn.softmax(e, axis=-1)
    return jnp.einsum('bon,bpn->bop', a, H)[:, 0, :]


if __name__ == "__main__":
    key = jax.random.PRNGKey(0)
    B, L = 2, 123                 # CNN output length = 123 - 56 = 67
    num_channels = 4
    prot_section_size = 4         # -> new_prot_length = 16, P = 16
    pkey, skey = jax.random.split(key)
    params = init_params(pkey, num_channels, prot_section_size)
    input_seq = jax.random.randint(skey, (B, L), 0, 26, dtype=jnp.int32)

    forward = jax.jit(dingo_forward, static_argnums=(2, 3))
    out = forward(input_seq, params, num_channels, prot_section_size)
    out = jax.block_until_ready(out)

    ref = reference(input_seq, params, num_channels, prot_section_size)
    assert out.shape == (B, num_channels * prot_section_size), out.shape
    assert jnp.allclose(out, ref, atol=1e-3, rtol=1e-3), (out, ref)
    print("KERNEL_OK")
</pallas_src>

<mosaic_0001>
module attributes {stable_mosaic.version = 11 : i64} {
  func.func @kernel(%arg0: i32, %arg1: memref<1x256xi32, #tpu.memory_space<vmem>>, %arg2: memref<88x384xf32, #tpu.memory_space<vmem>>, %arg3: memref<2x16xf32, #tpu.memory_space<vmem>>) attributes {dimension_semantics = [#tpu.dimension_semantics<arbitrary>], iteration_bounds = array<i64: 1>, scalar_prefetch = 0 : i64, scratch_operands = 0 : i64, tpu.core_type = #tpu.core_type<tc>, window_params = [{pipeline_mode = #tpu.pipeline_mode<synchronous>, transform_indices = @transform_0, window_bounds = array<i64: 1, 256>}, {pipeline_mode = #tpu.pipeline_mode<synchronous>, transform_indices = @transform_1, window_bounds = array<i64: 88, 384>}, {pipeline_mode = #tpu.pipeline_mode<synchronous>, transform_indices = @transform_2, window_bounds = array<i64: 2, 16>}]} {
    %c32 = arith.constant 32 : index
    %c0 = arith.constant 0 : index
    %0 = vector.load %arg2[%c32, %c0] : memref<88x384xf32, #tpu.memory_space<vmem>>, vector<24x32xf32>
    %c0_0 = arith.constant 0 : index
    %c0_1 = arith.constant 0 : index
    %1 = vector.load %arg1[%c0_0, %c0_1] : memref<1x256xi32, #tpu.memory_space<vmem>>, vector<1x256xi32>
    %2 = tpu.iota {dimensions = array<i32: 0>} : vector<32x256xi32>
    %3 = vector.broadcast %1 : vector<1x256xi32> to vector<32x256xi32>
    %4 = arith.cmpi eq, %2, %3 : vector<32x256xi32>
    %5 = arith.extui %4 : vector<32x256xi1> to vector<32x256xi32>
    %6 = arith.sitofp %5 : vector<32x256xi32> to vector<32x256xf32>
    %cst = arith.constant dense<0.000000e+00> : vector<24x256xf32>
    %7 = tpu.matmul %0, %6, %cst {dimension_numbers = #tpu.dot_dimension_numbers<[1], [0], [0], [1], [0, 0, 1, 1], [], []>} : vector<24x32xf32>, vector<32x256xf32>, vector<24x256xf32> -> vector<24x256xf32>
    %cst_2 = arith.constant 0.000000e+00 : f32
    %8 = vector.broadcast %cst_2 : f32 to vector<24x128xf32>
    %9 = tpu.concatenate %7, %8 in 1 : vector<24x256xf32>, vector<24x128xf32> -> vector<24x384xf32>
    %10 = vector.extract_strided_slice %9 {offsets = [0, 0], sizes = [24, 256], strides = [1, 1]} : vector<24x384xf32> to vector<24x256xf32>
    %11 = vector.extract_strided_slice %9 {offsets = [0, 1], sizes = [24, 256], strides = [1, 1]} : vector<24x384xf32> to vector<24x256xf32>
    %12 = vector.extract_strided_slice %9 {offsets = [0, 2], sizes = [24, 256], strides = [1, 1]} : vector<24x384xf32> to vector<24x256xf32>
    %13 = vector.extract_strided_slice %9 {offsets = [0, 3], sizes = [24, 256], strides = [1, 1]} : vector<24x384xf32> to vector<24x256xf32>
    %14 = vector.extract_strided_slice %9 {offsets = [0, 4], sizes = [24, 256], strides = [1, 1]} : vector<24x384xf32> to vector<24x256xf32>
    %15 = tpu.concatenate %10, %11, %12, %13, %14 in 0 : vector<24x256xf32>, vector<24x256xf32>, vector<24x256xf32>, vector<24x256xf32>, vector<24x256xf32> -> vector<120x256xf32>
    %c0_3 = arith.constant 0 : index
    %c0_4 = arith.constant 0 : index
    %16 = vector.load %arg2[%c0_3, %c0_4] : memref<88x384xf32, #tpu.memory_space<vmem>>, vector<8x120xf32>
    %cst_5 = arith.constant dense<0.000000e+00> : vector<8x256xf32>
    %17 = tpu.matmul %16, %15, %cst_5 {dimension_numbers = #tpu.dot_dimension_numbers<[1], [0], [0], [1], [0, 0, 1, 1], [], []>} : vector<8x120xf32>, vector<120x256xf32>, vector<8x256xf32> -> vector<8x256xf32>
    %18 = vector.extract_strided_slice %9 {offsets = [0, 5], sizes = [24, 256], strides = [1, 1]} : vector<24x384xf32> to vector<24x256xf32>
    %19 = vector.extract_strided_slice %9 {offsets = [0, 6], sizes = [24, 256], strides = [1, 1]} : vector<24x384xf32> to vector<24x256xf32>
    %20 = vector.extract_strided_slice %9 {offsets = [0, 7], sizes = [24, 256], strides = [1, 1]} : vector<24x384xf32> to vector<24x256xf32>
    %21 = vector.extract_strided_slice %9 {offsets = [0, 8], sizes = [24, 256], strides = [1, 1]} : vector<24x384xf32> to vector<24x256xf32>
    %22 = vector.extract_strided_slice %9 {offsets = [0, 9], sizes = [24, 256], strides = [1, 1]} : vector<24x384xf32> to vector<24x256xf32>
    %23 = tpu.concatenate %18, %19, %20, %21, %22 in 0 : vector<24x256xf32>, vector<24x256xf32>, vector<24x256xf32>, vector<24x256xf32>, vector<24x256xf32> -> vector<120x256xf32>
    %c0_6 = arith.constant 0 : index
    %c120 = arith.constant 120 : index
    %24 = vector.load %arg2[%c0_6, %c120] : memref<88x384xf32, #tpu.memory_space<vmem>>, vector<8x120xf32>
    %cst_7 = arith.constant dense<0.000000e+00> : vector<8x256xf32>
    %25 = tpu.matmul %24, %23, %cst_7 {dimension_numbers = #tpu.dot_dimension_numbers<[1], [0], [0], [1], [0, 0, 1, 1], [], []>} : vector<8x120xf32>, vector<120x256xf32>, vector<8x256xf32> -> vector<8x256xf32>
    %26 = arith.addf %17, %25 : vector<8x256xf32>
    %27 = vector.extract_strided_slice %9 {offsets = [0, 10], sizes = [24, 256], strides = [1, 1]} : vector<24x384xf32> to vector<24x256xf32>
    %28 = vector.extract_strided_slice %9 {offsets = [0, 11], sizes = [24, 256], strides = [1, 1]} : vector<24x384xf32> to vector<24x256xf32>
    %29 = vector.extract_strided_slice %9 {offsets = [0, 12], sizes = [24, 256], strides = [1, 1]} : vector<24x384xf32> to vector<24x256xf32>
    %30 = vector.extract_strided_slice %9 {offsets = [0, 13], sizes = [24, 256], strides = [1, 1]} : vector<24x384xf32> to vector<24x256xf32>
    %31 = vector.extract_strided_slice %9 {offsets = [0, 14], sizes = [24, 256], strides = [1, 1]} : vector<24x384xf32> to vector<24x256xf32>
    %32 = tpu.concatenate %27, %28, %29, %30, %31 in 0 : vector<24x256xf32>, vector<24x256xf32>, vector<24x256xf32>, vector<24x256xf32>, vector<24x256xf32> -> vector<120x256xf32>
    %c0_8 = arith.constant 0 : index
    %c240 = arith.constant 240 : index
    %33 = vector.load %arg2[%c0_8, %c240] : memref<88x384xf32, #tpu.memory_space<vmem>>, vector<8x120xf32>
    %cst_9 = arith.constant dense<0.000000e+00> : vector<8x256xf32>
    %34 = tpu.matmul %33, %32, %cst_9 {dimension_numbers = #tpu.dot_dimension_numbers<[1], [0], [0], [1], [0, 0, 1, 1], [], []>} : vector<8x120xf32>, vector<120x256xf32>, vector<8x256xf32> -> vector<8x256xf32>
    %35 = arith.addf %26, %34 : vector<8x256xf32>
    %c0_10 = arith.constant 0 : index
    %c360 = arith.constant 360 : index
    %36 = vector.load %arg2[%c0_10, %c360] : memref<88x384xf32, #tpu.memory_space<vmem>>, vector<8x1xf32>
    %37 = vector.broadcast %36 : vector<8x1xf32> to vector<8x256xf32>
    %38 = arith.addf %35, %37 : vector<8x256xf32>
    %cst_11 = arith.constant 0.000000e+00 : f32
    %39 = vector.broadcast %cst_11 : f32 to vector<8x256xf32>
    %40 = arith.maximumf %38, %39 : vector<8x256xf32>
    %cst_12 = arith.constant 0.000000e+00 : f32
    %41 = vector.broadcast %cst_12 : f32 to vector<8x128xf32>
    %42 = tpu.concatenate %40, %41 in 1 : vector<8x256xf32>, vector<8x128xf32> -> vector<8x384xf32>
    %43 = vector.extract_strided_slice %42 {offsets = [0, 0], sizes = [8, 256], strides = [1, 1]} : vector<8x384xf32> to vector<8x256xf32>
    %44 = vector.extract_strided_slice %42 {offsets = [0, 1], sizes = [8, 256], strides = [1, 1]} : vector<8x384xf32> to vector<8x256xf32>
    %45 = vector.extract_strided_slice %42 {offsets = [0, 2], sizes = [8, 256], strides = [1, 1]} : vector<8x384xf32> to vector<8x256xf32>
    %46 = vector.extract_strided_slice %42 {offsets = [0, 3], sizes = [8, 256], strides = [1, 1]} : vector<8x384xf32> to vector<8x256xf32>
    %47 = vector.extract_strided_slice %42 {offsets = [0, 4], sizes = [8, 256], strides = [1, 1]} : vector<8x384xf32> to vector<8x256xf32>
    %48 = vector.extract_strided_slice %42 {offsets = [0, 5], sizes = [8, 256], strides = [1, 1]} : vector<8x384xf32> to vector<8x256xf32>
    %49 = vector.extract_strided_slice %42 {offsets = [0, 6], sizes = [8, 256], strides = [1, 1]} : vector<8x384xf32> to vector<8x256xf32>
    %50 = vector.extract_strided_slice %42 {offsets = [0, 7], sizes = [8, 256], strides = [1, 1]} : vector<8x384xf32> to vector<8x256xf32>
    %51 = vector.extract_strided_slice %42 {offsets = [0, 8], sizes = [8, 256], strides = [1, 1]} : vector<8x384xf32> to vector<8x256xf32>
    %52 = vector.extract_strided_slice %42 {offsets = [0, 9], sizes = [8, 256], strides = [1, 1]} : vector<8x384xf32> to vector<8x256xf32>
    %53 = vector.extract_strided_slice %42 {offsets = [0, 10], sizes = [8, 256], strides = [1, 1]} : vector<8x384xf32> to vector<8x256xf32>
    %54 = vector.extract_strided_slice %42 {offsets = [0, 11], sizes = [8, 256], strides = [1, 1]} : vector<8x384xf32> to vector<8x256xf32>
    %55 = vector.extract_strided_slice %42 {offsets = [0, 12], sizes = [8, 256], strides = [1, 1]} : vector<8x384xf32> to vector<8x256xf32>
    %56 = vector.extract_strided_slice %42 {offsets = [0, 13], sizes = [8, 256], strides = [1, 1]} : vector<8x384xf32> to vector<8x256xf32>
    %57 = vector.extract_strided_slice %42 {offsets = [0, 14], sizes = [8, 256], strides = [1, 1]} : vector<8x384xf32> to vector<8x256xf32>
    %58 = tpu.concatenate %43, %44, %45, %46, %47, %48, %49, %50, %51, %52, %53, %54, %55, %56, %57 in 0 : vector<8x256xf32>, vector<8x256xf32>, vector<8x256xf32>, vector<8x256xf32>, vector<8x256xf32>, vector<8x256xf32>, vector<8x256xf32>, vector<8x256xf32>, vector<8x256xf32>, vector<8x256xf32>, vector<8x256xf32>, vector<8x256xf32>, vector<8x256xf32>, vector<8x256xf32>, vector<8x256xf32> -> vector<120x256xf32>
    %c8 = arith.constant 8 : index
    %c0_13 = arith.constant 0 : index
    %59 = vector.load %arg2[%c8, %c0_13] : memref<88x384xf32, #tpu.memory_space<vmem>>, vector<8x120xf32>
    %cst_14 = arith.constant dense<0.000000e+00> : vector<8x256xf32>
    %60 = tpu.matmul %59, %58, %cst_14 {dimension_numbers = #tpu.dot_dimension_numbers<[1], [0], [0], [1], [0, 0, 1, 1], [], []>} : vector<8x120xf32>, vector<120x256xf32>, vector<8x256xf32> -> vector<8x256xf32>
    %c8_15 = arith.constant 8 : index
    %c120_16 = arith.constant 120 : index
    %61 = vector.load %arg2[%c8_15, %c120_16] : memref<88x384xf32, #tpu.memory_space<vmem>>, vector<8x1xf32>
    %62 = vector.broadcast %61 : vector<8x1xf32> to vector<8x256xf32>
    %63 = arith.addf %60, %62 : vector<8x256xf32>
    %cst_17 = arith.constant 0.000000e+00 : f32
    %64 = vector.broadcast %cst_17 : f32 to vector<8x256xf32>
    %65 = arith.maximumf %63, %64 : vector<8x256xf32>
    %cst_18 = arith.constant 0.000000e+00 : f32
    %66 = vector.broadcast %cst_18 : f32 to vector<8x128xf32>
    %67 = tpu.concatenate %65, %66 in 1 : vector<8x256xf32>, vector<8x128xf32> -> vector<8x384xf32>
    %68 = vector.extract_strided_slice %67 {offsets = [0, 0], sizes = [8, 256], strides = [1, 1]} : vector<8x384xf32> to vector<8x256xf32>
    %69 = vector.extract_strided_slice %67 {offsets = [0, 1], sizes = [8, 256], strides = [1, 1]} : vector<8x384xf32> to vector<8x256xf32>
    %70 = vector.extract_strided_slice %67 {offsets = [0, 2], sizes = [8, 256], strides = [1, 1]} : vector<8x384xf32> to vector<8x256xf32>
    %71 = vector.extract_strided_slice %67 {offsets = [0, 3], sizes = [8, 256], strides = [1, 1]} : vector<8x384xf32> to vector<8x256xf32>
    %72 = vector.extract_strided_slice %67 {offsets = [0, 4], sizes = [8, 256], strides = [1, 1]} : vector<8x384xf32> to vector<8x256xf32>
    %73 = vector.extract_strided_slice %67 {offsets = [0, 5], sizes = [8, 256], strides = [1, 1]} : vector<8x384xf32> to vector<8x256xf32>
    %74 = vector.extract_strided_slice %67 {offsets = [0, 6], sizes = [8, 256], strides = [1, 1]} : vector<8x384xf32> to vector<8x256xf32>
    %75 = vector.extract_strided_slice %67 {offsets = [0, 7], sizes = [8, 256], strides = [1, 1]} : vector<8x384xf32> to vector<8x256xf32>
    %76 = vector.extract_strided_slice %67 {offsets = [0, 8], sizes = [8, 256], strides = [1, 1]} : vector<8x384xf32> to vector<8x256xf32>
    %77 = vector.extract_strided_slice %67 {offsets = [0, 9], sizes = [8, 256], strides = [1, 1]} : vector<8x384xf32> to vector<8x256xf32>
    %78 = vector.extract_strided_slice %67 {offsets = [0, 10], sizes = [8, 256], strides = [1, 1]} : vector<8x384xf32> to vector<8x256xf32>
    %79 = vector.extract_strided_slice %67 {offsets = [0, 11], sizes = [8, 256], strides = [1, 1]} : vector<8x384xf32> to vector<8x256xf32>
    %80 = vector.extract_strided_slice %67 {offsets = [0, 12], sizes = [8, 256], strides = [1, 1]} : vector<8x384xf32> to vector<8x256xf32>
    %81 = vector.extract_strided_slice %67 {offsets = [0, 13], sizes = [8, 256], strides = [1, 1]} : vector<8x384xf32> to vector<8x256xf32>
    %82 = vector.extract_strided_slice %67 {offsets = [0, 14], sizes = [8, 256], strides = [1, 1]} : vector<8x384xf32> to vector<8x256xf32>
    %83 = tpu.concatenate %68, %69, %70, %71, %72, %73, %74, %75, %76, %77, %78, %79, %80, %81, %82 in 0 : vector<8x256xf32>, vector<8x256xf32>, vector<8x256xf32>, vector<8x256xf32>, vector<8x256xf32>, vector<8x256xf32>, vector<8x256xf32>, vector<8x256xf32>, vector<8x256xf32>, vector<8x256xf32>, vector<8x256xf32>, vector<8x256xf32>, vector<8x256xf32>, vector<8x256xf32>, vector<8x256xf32> -> vector<120x256xf32>
    %c16 = arith.constant 16 : index
    %c0_19 = arith.constant 0 : index
    %84 = vector.load %arg2[%c16, %c0_19] : memref<88x384xf32, #tpu.memory_space<vmem>>, vector<8x120xf32>
    %cst_20 = arith.constant dense<0.000000e+00> : vector<8x256xf32>
    %85 = tpu.matmul %84, %83, %cst_20 {dimension_numbers = #tpu.dot_dimension_numbers<[1], [0], [0], [1], [0, 0, 1, 1], [], []>} : vector<8x120xf32>, vector<120x256xf32>, vector<8x256xf32> -> vector<8x256xf32>
    %c16_21 = arith.constant 16 : index
    %c120_22 = arith.constant 120 : index
    %86 = vector.load %arg2[%c16_21, %c120_22] : memref<88x384xf32, #tpu.memory_space<vmem>>, vector<8x1xf32>
    %87 = vector.broadcast %86 : vector<8x1xf32> to vector<8x256xf32>
    %88 = arith.addf %85, %87 : vector<8x256xf32>
    %cst_23 = arith.constant 0.000000e+00 : f32
    %89 = vector.broadcast %cst_23 : f32 to vector<8x256xf32>
    %90 = arith.maximumf %88, %89 : vector<8x256xf32>
    %cst_24 = arith.constant 0.000000e+00 : f32
    %91 = vector.broadcast %cst_24 : f32 to vector<8x128xf32>
    %92 = tpu.concatenate %90, %91 in 1 : vector<8x256xf32>, vector<8x128xf32> -> vector<8x384xf32>
    %93 = vector.extract_strided_slice %92 {offsets = [0, 0], sizes = [8, 256], strides = [1, 1]} : vector<8x384xf32> to vector<8x256xf32>
    %94 = vector.extract_strided_slice %92 {offsets = [0, 1], sizes = [8, 256], strides = [1, 1]} : vector<8x384xf32> to vector<8x256xf32>
    %95 = vector.extract_strided_slice %92 {offsets = [0, 2], sizes = [8, 256], strides = [1, 1]} : vector<8x384xf32> to vector<8x256xf32>
    %96 = vector.extract_strided_slice %92 {offsets = [0, 3], sizes = [8, 256], strides = [1, 1]} : vector<8x384xf32> to vector<8x256xf32>
    %97 = vector.extract_strided_slice %92 {offsets = [0, 4], sizes = [8, 256], strides = [1, 1]} : vector<8x384xf32> to vector<8x256xf32>
    %98 = vector.extract_strided_slice %92 {offsets = [0, 5], sizes = [8, 256], strides = [1, 1]} : vector<8x384xf32> to vector<8x256xf32>
    %99 = vector.extract_strided_slice %92 {offsets = [0, 6], sizes = [8, 256], strides = [1, 1]} : vector<8x384xf32> to vector<8x256xf32>
    %100 = vector.extract_strided_slice %92 {offsets = [0, 7], sizes = [8, 256], strides = [1, 1]} : vector<8x384xf32> to vector<8x256xf32>
    %101 = vector.extract_strided_slice %92 {offsets = [0, 8], sizes = [8, 256], strides = [1, 1]} : vector<8x384xf32> to vector<8x256xf32>
    %102 = vector.extract_strided_slice %92 {offsets = [0, 9], sizes = [8, 256], strides = [1, 1]} : vector<8x384xf32> to vector<8x256xf32>
    %103 = vector.extract_strided_slice %92 {offsets = [0, 10], sizes = [8, 256], strides = [1, 1]} : vector<8x384xf32> to vector<8x256xf32>
    %104 = vector.extract_strided_slice %92 {offsets = [0, 11], sizes = [8, 256], strides = [1, 1]} : vector<8x384xf32> to vector<8x256xf32>
    %105 = vector.extract_strided_slice %92 {offsets = [0, 12], sizes = [8, 256], strides = [1, 1]} : vector<8x384xf32> to vector<8x256xf32>
    %106 = vector.extract_strided_slice %92 {offsets = [0, 13], sizes = [8, 256], strides = [1, 1]} : vector<8x384xf32> to vector<8x256xf32>
    %107 = vector.extract_strided_slice %92 {offsets = [0, 14], sizes = [8, 256], strides = [1, 1]} : vector<8x384xf32> to vector<8x256xf32>
    %108 = tpu.concatenate %93, %94, %95, %96, %97, %98, %99, %100, %101, %102, %103, %104, %105, %106, %107 in 0 : vector<8x256xf32>, vector<8x256xf32>, vector<8x256xf32>, vector<8x256xf32>, vector<8x256xf32>, vector<8x256xf32>, vector<8x256xf32>, vector<8x256xf32>, vector<8x256xf32>, vector<8x256xf32>, vector<8x256xf32>, vector<8x256xf32>, vector<8x256xf32>, vector<8x256xf32>, vector<8x256xf32> -> vector<120x256xf32>
    %c24 = arith.constant 24 : index
    %c0_25 = arith.constant 0 : index
    %109 = vector.load %arg2[%c24, %c0_25] : memref<88x384xf32, #tpu.memory_space<vmem>>, vector<8x120xf32>
    %cst_26 = arith.constant dense<0.000000e+00> : vector<8x256xf32>
    %110 = tpu.matmul %109, %108, %cst_26 {dimension_numbers = #tpu.dot_dimension_numbers<[1], [0], [0], [1], [0, 0, 1, 1], [], []>} : vector<8x120xf32>, vector<120x256xf32>, vector<8x256xf32> -> vector<8x256xf32>
    %c24_27 = arith.constant 24 : index
    %c120_28 = arith.constant 120 : index
    %111 = vector.load %arg2[%c24_27, %c120_28] : memref<88x384xf32, #tpu.memory_space<vmem>>, vector<8x1xf32>
    %112 = vector.broadcast %111 : vector<8x1xf32> to vector<8x256xf32>
    %113 = arith.addf %110, %112 : vector<8x256xf32>
    %cst_29 = arith.constant 0.000000e+00 : f32
    %114 = vector.broadcast %cst_29 : f32 to vector<8x256xf32>
    %115 = arith.maximumf %113, %114 : vector<8x256xf32>
    %cst_30 = arith.constant 0.000000e+00 : f32
    %116 = vector.broadcast %cst_30 : f32 to vector<8x128xf32>
    %117 = tpu.concatenate %115, %116 in 1 : vector<8x256xf32>, vector<8x128xf32> -> vector<8x384xf32>
    %118 = vector.extract_strided_slice %117 {offsets = [0, 1], sizes = [8, 256], strides = [1, 1]} : vector<8x384xf32> to vector<8x256xf32>
    %119 = vector.extract_strided_slice %117 {offsets = [0, 17], sizes = [8, 256], strides = [1, 1]} : vector<8x384xf32> to vector<8x256xf32>
    %120 = vector.extract_strided_slice %117 {offsets = [0, 33], sizes = [8, 256], strides = [1, 1]} : vector<8x384xf32> to vector<8x256xf32>
    %121 = vector.extract_strided_slice %117 {offsets = [0, 49], sizes = [8, 256], strides = [1, 1]} : vector<8x384xf32> to vector<8x256xf32>
    %122 = tpu.concatenate %118, %119, %120, %121 in 0 : vector<8x256xf32>, vector<8x256xf32>, vector<8x256xf32>, vector<8x256xf32> -> vector<32x256xf32>
    %c72 = arith.constant 72 : index
    %c0_31 = arith.constant 0 : index
    %123 = vector.load %arg2[%c72, %c0_31] : memref<88x384xf32, #tpu.memory_space<vmem>>, vector<16x32xf32>
    %cst_32 = arith.constant dense<0.000000e+00> : vector<16x256xf32>
    %124 = tpu.matmul %123, %122, %cst_32 {dimension_numbers = #tpu.dot_dimension_numbers<[1], [0], [0], [1], [0, 0, 1, 1], [], []>} : vector<16x32xf32>, vector<32x256xf32>, vector<16x256xf32> -> vector<16x256xf32>
    %c56 = arith.constant 56 : index
    %c0_33 = arith.constant 0 : index
    %125 = vector.load %arg2[%c56, %c0_33] : memref<88x384xf32, #tpu.memory_space<vmem>>, vector<16x16xf32>
    %c56_34 = arith.constant 56 : index
    %c16_35 = arith.constant 16 : index
    %126 = vector.load %arg2[%c56_34, %c16_35] : memref<88x384xf32, #tpu.memory_space<vmem>>, vector<16x1xf32>
    %cst_36 = arith.constant dense<0.000000e+00> : vector<16x256xf32>
    %127 = tpu.matmul %125, %124, %cst_36 {dimension_numbers = #tpu.dot_dimension_numbers<[1], [0], [0], [1], [0, 0, 1, 1], [], []>} : vector<16x16xf32>, vector<16x256xf32>, vector<16x256xf32> -> vector<16x256xf32>
    %128 = math.tanh %127 : vector<16x256xf32>
    %129 = vector.broadcast %126 : vector<16x1xf32> to vector<16x256xf32>
    %130 = arith.mulf %129, %128 : vector<16x256xf32>
    %cst_37 = arith.constant dense<0.000000e+00> : vector<256xf32>
    %131 = vector.multi_reduction <add>, %130, %cst_37 [0] : vector<16x256xf32> to vector<256xf32>
    %132 = vector.shape_cast %131 : vector<256xf32> to vector<1x256xf32>
    %133 = tpu.iota {dimensions = array<i32: 1>} : vector<2x256xi32>
    %134 = tpu.iota {dimensions = array<i32: 0>} : vector<2x256xi32>
    %c128_i32 = arith.constant 128 : i32
    %135 = vector.broadcast %c128_i32 : i32 to vector<2x256xi32>
    %136 = arith.muli %134, %135 : vector<2x256xi32>
    %137 = arith.cmpi sge, %133, %136 : vector<2x256xi32>
    %c16_i32 = arith.constant 16 : i32
    %138 = vector.broadcast %c16_i32 : i32 to vector<2x256xi32>
    %139 = arith.addi %136, %138 : vector<2x256xi32>
    %140 = arith.cmpi slt, %133, %139 : vector<2x256xi32>
    %141 = arith.andi %137, %140 : vector<2x256xi1>
    %142 = vector.shape_cast %132 : vector<1x256xf32> to vector<1x256xf32>
    %143 = vector.broadcast %142 : vector<1x256xf32> to vector<2x256xf32>
    %cst_38 = arith.constant -1.000000e+30 : f32
    %144 = vector.broadcast %cst_38 : f32 to vector<2x256xf32>
    %145 = arith.select %141, %143, %144 : vector<2x256xi1>, vector<2x256xf32>
    %cst_39 = arith.constant dense<0xFF800000> : vector<2xf32>
    %146 = vector.multi_reduction <maximumf>, %145, %cst_39 [1] : vector<2x256xf32> to vector<2xf32>
    %147 = vector.shape_cast %146 : vector<2xf32> to vector<2x1xf32>
    %148 = vector.broadcast %147 : vector<2x1xf32> to vector<2x256xf32>
    %149 = arith.subf %145, %148 : vector<2x256xf32>
    %150 = math.exp %149 : vector<2x256xf32>
    %cst_40 = arith.constant dense<0.000000e+00> : vector<2xf32>
    %151 = vector.multi_reduction <add>, %150, %cst_40 [1] : vector<2x256xf32> to vector<2xf32>
    %152 = vector.shape_cast %151 : vector<2xf32> to vector<2x1xf32>
    %153 = vector.broadcast %152 : vector<2x1xf32> to vector<2x256xf32>
    %154 = arith.divf %150, %153 : vector<2x256xf32>
    %cst_41 = arith.constant dense<0.000000e+00> : vector<2x16xf32>
    %155 = tpu.matmul %154, %124, %cst_41 {dimension_numbers = #tpu.dot_dimension_numbers<[1], [1], [0], [0], [0, 0, 1, 0], [], []>} : vector<2x256xf32>, vector<16x256xf32>, vector<2x16xf32> -> vector<2x16xf32>
    %c0_42 = arith.constant 0 : index
    %c0_43 = arith.constant 0 : index
    %156 = vector.load %arg3[%c0_42, %c0_43] : memref<2x16xf32, #tpu.memory_space<vmem>>, vector<2x16xf32>
    tpu.vector_store %arg3[%c0_42, %c0_43], %155 {strides = array<i32>} : memref<2x16xf32, #tpu.memory_space<vmem>>, vector<2x16xf32>,
    return
  }
  func.func @transform_0(%arg0: i32) -> (i32, i32) {
    %c0_i32 = arith.constant 0 : i32
    %c0_i32_0 = arith.constant 0 : i32
    %c0_i32_1 = arith.constant 0 : i32
    return %c0_i32, %c0_i32_0 : i32, i32
  }
  func.func @transform_1(%arg0: i32) -> (i32, i32) {
    %c0_i32 = arith.constant 0 : i32
    %c0_i32_0 = arith.constant 0 : i32
    %c0_i32_1 = arith.constant 0 : i32
    return %c0_i32, %c0_i32_0 : i32, i32
  }
  func.func @transform_2(%arg0: i32) -> (i32, i32) {
    %c0_i32 = arith.constant 0 : i32
    %c0_i32_0 = arith.constant 0 : i32
    %c0_i32_1 = arith.constant 0 : i32
    return %c0_i32, %c0_i32_0 : i32, i32
  }
}

</mosaic_0001>

<llo_original>
// kernel: dingo_forward.1
$region0: #{dingo_forward.1}
  #allocation0 [shape = 'u32[]', space=smem, size = 0x4, offset = 0x4, fixed_abs, tag = 'smem constant byte address 0x4 - core index']
  #allocation1 [shape = 'u32[72,128]{1,0:T(1,128)}', space=vmem, size = 0x9000, scoped, tag = 'internal scratch']
  %s0 = inlined_call_operand.vmem [shape: s32[1,256], index: 0, kind: input, shape index: {}]
  %s1 = inlined_call_operand.vmem [shape: f32[88,384], index: 1, kind: input, shape index: {}]
  %s2 = inlined_call_operand.hbm [shape: f32[2,16], index: 2, kind: output, shape index: {}]
  %s3 = sld [smem:[#allocation0]]
  $region18: #{dingo_forward.1} parent=0
    _
  %s5 = ssub.s32 1, %s3
  %s6 = scalar_select 0, %s5, %s3
  $region1: #{dingo_forward.1} parent=0
    #allocation2 [shape = 'u8[1024]{0}', space=vmem, size = 0x400, scoped, tag = 'output window, operand 0, single buffered']
    #allocation3 [shape = 's32[1]{0}', space=sflag, size = 0x4, scoped, tag = 'scoped memory for dingo_forward.1']
    %7 = vsyncpa [#allocation3], 0
    // Predicated region
    $region2: #{dingo_forward.1} parent=1 // pred_check
      _
    $region3: #{dingo_forward.1} parent=1 // pred_check_branch
      %9 = sbr.rel (0) target = $region5
    $region4: #{dingo_forward.1} parent=1 // pred_region
      _
    $region5: #{dingo_forward.1} parent=1 // pred_fallthru
      _
    // Predicated region
    $region6: #{dingo_forward.1} parent=1 // pred_check
      _
    $region7: #{dingo_forward.1} parent=1 // pred_check_branch
      %11 = sbr.rel (0) target = $region9
    $region8: #{dingo_forward.1} parent=1 // pred_region
      _
    $region9: #{dingo_forward.1} parent=1 // pred_fallthru
      _
    %v12 = vld [vmem:[%s1 + $0x60] sm:$0xff]
    %v13 = vld [vmem:[%s1 + $0x78] sm:$0xff]
    %v14 = vld [vmem:[%s1 + $0x90] sm:$0xff]
    %v15 = vld [vmem:[%s0] sm:$0x3]
    %v16 = vlaneseq
    %v17 = vshrl.u32 %v16, 7
    %v18 = vadd.s32 %v17, 8
    %v19 = vadd.s32 %v17, 16
    %v20 = vadd.s32 %v17, 24
    %v21 = vperm.slane %v15, 0
    %v22 = vperm.slane %v15, 1
    %vm23 = vcmp.eq.s32.totalorder %v17, %v21
    %vm24 = vcmp.eq.s32.totalorder %v17, %v22
    %vm25 = vcmp.eq.s32.totalorder %v18, %v21
    %vm26 = vcmp.eq.s32.totalorder %v18, %v22
    %vm27 = vcmp.eq.s32.totalorder %v19, %v21
    %vm28 = vcmp.eq.s32.totalorder %v19, %v22
    %vm29 = vcmp.eq.s32.totalorder %v20, %v21
    %vm30 = vcmp.eq.s32.totalorder %v20, %v22
    %v31 = vsel %vm23, 1, 0
    %v32 = vsel %vm24, 1, 0
    %v33 = vsel %vm25, 1, 0
    %v34 = vsel %vm26, 1, 0
    %v35 = vsel %vm27, 1, 0
    %v36 = vsel %vm28, 1, 0
    %v37 = vsel %vm29, 1, 0
    %v38 = vsel %vm30, 1, 0
    %v39 = vcvt.s32.f32 %v31
    %v40 = vcvt.s32.f32 %v32
    %v41 = vcvt.s32.f32 %v33
    %v42 = vcvt.s32.f32 %v34
    %v43 = vcvt.s32.f32 %v35
    %v44 = vcvt.s32.f32 %v36
    %v45 = vcvt.s32.f32 %v37
    %v46 = vcvt.s32.f32 %v38
    %vm47 = vcmask 261120
    %v49 = vsel %vm47, %v12, 0
    %v52 = vsel %vm47, %v13, 0
    %v55 = vsel %vm47, %v14, 0
    %57 = vmatpush.msra.mxu0 0.0
    %58 = vmatpush.msra.mxu0 0.0
    %59 = vmatpush.msra.mxu0 0.0
    %60 = vmatpush.msra.mxu0 0.0
    %61 = vmatpush.msra.mxu0 0.0
    %62 = vmatpush.msra.mxu0 0.0
    %63 = vmatpush.msra.mxu0 0.0
    %64 = vmatpush.msra.mxu0 0.0
    %65 = vmatpush.msra.mxu0 0.0
    %66 = vmatpush.msra.mxu0 0.0
    %67 = vmatpush.msra.mxu0 0.0
    %68 = vmatpush.msra.mxu0 0.0
    %69 = vmatpush.msra.mxu0 %v45
    %70 = vmatpush.msra.mxu0 %v43
    %71 = vmatpush.msra.mxu0 %v41
    %72 = vmatpush.msra.mxu0 %v39
    %73 = vmatmul.f32.gmra.mxu0 %v49
    %v74 = vpop.f32.mrf.mxu0
    %v75 = vadd.f32 0.0, %v74
    %76 = vmatmul.f32.gmra.mxu0 %v52
    %v77 = vpop.f32.mrf.mxu0
    %v78 = vadd.f32 0.0, %v77
    %79 = vmatmul.f32.gmra.mxu0 %v55
    %v80 = vpop.f32.mrf.mxu0
    %v81 = vadd.f32 0.0, %v80
    %82 = vdwg.mxu0
    %83 = vmatpush.msra.mxu0 0.0
    %84 = vmatpush.msra.mxu0 0.0
    %85 = vmatpush.msra.mxu0 0.0
    %86 = vmatpush.msra.mxu0 0.0
    %87 = vmatpush.msra.mxu0 0.0
    %88 = vmatpush.msra.mxu0 0.0
    %89 = vmatpush.msra.mxu0 0.0
    %90 = vmatpush.msra.mxu0 0.0
    %91 = vmatpush.msra.mxu0 0.0
    %92 = vmatpush.msra.mxu0 0.0
    %93 = vmatpush.msra.mxu0 0.0
    %94 = vmatpush.msra.mxu0 0.0
    %95 = vmatpush.msra.mxu0 %v46
    %96 = vmatpush.msra.mxu0 %v44
    %97 = vmatpush.msra.mxu0 %v42
    %98 = vmatpush.msra.mxu0 %v40
    %99 = vmatmul.f32.gmra.mxu0 %v49
    %v100 = vpop.f32.mrf.mxu0
    %v101 = vadd.f32 0.0, %v100
    %102 = vmatmul.f32.gmra.mxu0 %v52
    %v103 = vpop.f32.mrf.mxu0
    %v104 = vadd.f32 0.0, %v103
    %105 = vmatmul.f32.gmra.mxu0 %v55
    %v106 = vpop.f32.mrf.mxu0
    %v107 = vadd.f32 0.0, %v106
    %108 = vdwg.mxu0
    %116 = vrot.lane.b32.xlu0 %v75, 127
    %v117 = vpop.permute.xlu0 %116
    %118 = vrot.lane.b32.xlu0 %v101, 127
    %v119 = vpop.permute.xlu0 %118
    %120 = vrot.lane.b32.xlu0 0.0, 127
    %v121 = vpop.permute.xlu0 %120
    %122 = vrot.lane.b32.xlu0 %v78, 127
    %v123 = vpop.permute.xlu0 %122
    %124 = vrot.lane.b32.xlu0 %v104, 127
    %v125 = vpop.permute.xlu0 %124
    %126 = vrot.lane.b32.xlu0 %v81, 127
    %v127 = vpop.permute.xlu0 %126
    %128 = vrot.lane.b32.xlu0 %v107, 127
    %v129 = vpop.permute.xlu0 %128
    %vm130 = vcmask 1039360
    %v131 = vsel %vm130, %v117, %v119
    %v132 = vsel %vm130, %v119, %v121
    %v133 = vsel %vm130, %v123, %v125
    %v134 = vsel %vm130, %v125, %v121
    %v135 = vsel %vm130, %v127, %v129
    %v136 = vsel %vm130, %v129, %v121
    %143 = vrot.lane.b32.xlu0 %v75, 126
    %v144 = vpop.permute.xlu0 %143
    %145 = vrot.lane.b32.xlu0 %v101, 126
    %v146 = vpop.permute.xlu0 %145
    %147 = vrot.lane.b32.xlu0 0.0, 126
    %v148 = vpop.permute.xlu0 %147
    %149 = vrot.lane.b32.xlu0 %v78, 126
    %v150 = vpop.permute.xlu0 %149
    %151 = vrot.lane.b32.xlu0 %v104, 126
    %v152 = vpop.permute.xlu0 %151
    %153 = vrot.lane.b32.xlu0 %v81, 126
    %v154 = vpop.permute.xlu0 %153
    %155 = vrot.lane.b32.xlu0 %v107, 126
    %v156 = vpop.permute.xlu0 %155
    %vm157 = vcmask 1031168
    %v158 = vsel %vm157, %v144, %v146
    %v159 = vsel %vm157, %v146, %v148
    %v160 = vsel %vm157, %v150, %v152
    %v161 = vsel %vm157, %v152, %v148
    %v162 = vsel %vm157, %v154, %v156
    %v163 = vsel %vm157, %v156, %v148
    %170 = vrot.lane.b32.xlu0 %v75, 125
    %v171 = vpop.permute.xlu0 %170
    %172 = vrot.lane.b32.xlu0 %v101, 125
    %v173 = vpop.permute.xlu0 %172
    %174 = vrot.lane.b32.xlu0 0.0, 125
    %v175 = vpop.permute.xlu0 %174
    %176 = vrot.lane.b32.xlu0 %v78, 125
    %v177 = vpop.permute.xlu0 %176
    %178 = vrot.lane.b32.xlu0 %v104, 125
    %v179 = vpop.permute.xlu0 %178
    %180 = vrot.lane.b32.xlu0 %v81, 125
    %v181 = vpop.permute.xlu0 %180
    %182 = vrot.lane.b32.xlu0 %v107, 125
    %v183 = vpop.permute.xlu0 %182
    %vm184 = vcmask 1022976
    %v185 = vsel %vm184, %v171, %v173
    %v186 = vsel %vm184, %v173, %v175
    %v187 = vsel %vm184, %v177, %v179
    %v188 = vsel %vm184, %v179, %v175
    %v189 = vsel %vm184, %v181, %v183
    %v190 = vsel %vm184, %v183, %v175
    %197 = vrot.lane.b32.xlu0 %v75, 124
    %v198 = vpop.permute.xlu0 %197
    %199 = vrot.lane.b32.xlu0 %v101, 124
    %v200 = vpop.permute.xlu0 %199
    %201 = vrot.lane.b32.xlu0 0.0, 124
    %v202 = vpop.permute.xlu0 %201
    %203 = vrot.lane.b32.xlu0 %v78, 124
    %v204 = vpop.permute.xlu0 %203
    %205 = vrot.lane.b32.xlu0 %v104, 124
    %v206 = vpop.permute.xlu0 %205
    %207 = vrot.lane.b32.xlu0 %v81, 124
    %v208 = vpop.permute.xlu0 %207
    %209 = vrot.lane.b32.xlu0 %v107, 124
    %v210 = vpop.permute.xlu0 %209
    %vm211 = vcmask 1014784
    %v212 = vsel %vm211, %v198, %v200
    %v213 = vsel %vm211, %v200, %v202
    %v214 = vsel %vm211, %v204, %v206
    %v215 = vsel %vm211, %v206, %v202
    %v216 = vsel %vm211, %v208, %v210
    %v217 = vsel %vm211, %v210, %v202
    %v224 = vld [vmem:[%s1] sm:$0xff]
    %v225 = vld [vmem:[%s1 + $0x8] sm:$0xff]
    %228 = vrot.lane.b32.xlu0 %v224, 8
    %v229 = vpop.permute.xlu0 %228
    %230 = vrot.lane.b32.xlu0 %v225, 8
    %v231 = vpop.permute.xlu0 %230
    %vm232 = vcmask 64512
    %v233 = vsel %vm232, %v229, %v231
    %234 = vrot.lane.b32.xlu0 %v75, 123
    %v235 = vpop.permute.xlu0 %234
    %236 = vrot.lane.b32.xlu0 %v101, 123
    %v237 = vpop.permute.xlu0 %236
    %238 = vrot.lane.b32.xlu0 0.0, 123
    %v239 = vpop.permute.xlu0 %238
    %240 = vrot.lane.b32.xlu0 %v78, 123
    %v241 = vpop.permute.xlu0 %240
    %242 = vrot.lane.b32.xlu0 %v104, 123
    %v243 = vpop.permute.xlu0 %242
    %244 = vrot.lane.b32.xlu0 %v81, 123
    %v245 = vpop.permute.xlu0 %244
    %246 = vrot.lane.b32.xlu0 %v107, 123
    %v247 = vpop.permute.xlu0 %246
    %248 = vrot.lane.b32.xlu0 %v131, 123
    %v249 = vpop.permute.xlu0 %248
    %250 = vrot.lane.b32.xlu0 %v132, 123
    %v251 = vpop.permute.xlu0 %250
    %252 = vrot.lane.b32.xlu0 %v121, 123
    %v253 = vpop.permute.xlu0 %252
    %254 = vrot.lane.b32.xlu0 %v133, 123
    %v255 = vpop.permute.xlu0 %254
    %256 = vrot.lane.b32.xlu0 %v134, 123
    %v257 = vpop.permute.xlu0 %256
    %258 = vrot.lane.b32.xlu0 %v135, 123
    %v259 = vpop.permute.xlu0 %258
    %260 = vrot.lane.b32.xlu0 %v136, 123
    %v261 = vpop.permute.xlu0 %260
    %262 = vrot.lane.b32.xlu0 %v158, 123
    %v263 = vpop.permute.xlu0 %262
    %264 = vrot.lane.b32.xlu0 %v159, 123
    %v265 = vpop.permute.xlu0 %264
    %266 = vrot.lane.b32.xlu0 %v148, 123
    %v267 = vpop.permute.xlu0 %266
    %268 = vrot.lane.b32.xlu0 %v160, 123
    %v269 = vpop.permute.xlu0 %268
    %270 = vrot.lane.b32.xlu0 %v161, 123
    %v271 = vpop.permute.xlu0 %270
    %272 = vrot.lane.b32.xlu0 %v162, 123
    %v273 = vpop.permute.xlu0 %272
    %274 = vrot.lane.b32.xlu0 %v163, 123
    %v275 = vpop.permute.xlu0 %274
    %276 = vrot.lane.b32.xlu0 %v185, 123
    %v277 = vpop.permute.xlu0 %276
    %278 = vrot.lane.b32.xlu0 %v186, 123
    %v279 = vpop.permute.xlu0 %278
    %280 = vrot.lane.b32.xlu0 %v175, 123
    %v281 = vpop.permute.xlu0 %280
    %282 = vrot.lane.b32.xlu0 %v187, 123
    %v283 = vpop.permute.xlu0 %282
    %284 = vrot.lane.b32.xlu0 %v188, 123
    %v285 = vpop.permute.xlu0 %284
    %286 = vrot.lane.b32.xlu0 %v189, 123
    %v287 = vpop.permute.xlu0 %286
    %288 = vrot.lane.b32.xlu0 %v190, 123
    %v289 = vpop.permute.xlu0 %288
    %290 = vrot.lane.b32.xlu0 %v212, 123
    %v291 = vpop.permute.xlu0 %290
    %292 = vrot.lane.b32.xlu0 %v213, 123
    %v293 = vpop.permute.xlu0 %292
    %294 = vrot.lane.b32.xlu0 %v202, 123
    %v295 = vpop.permute.xlu0 %294
    %296 = vrot.lane.b32.xlu0 %v214, 123
    %v297 = vpop.permute.xlu0 %296
    %298 = vrot.lane.b32.xlu0 %v215, 123
    %v299 = vpop.permute.xlu0 %298
    %300 = vrot.lane.b32.xlu0 %v216, 123
    %v301 = vpop.permute.xlu0 %300
    %302 = vrot.lane.b32.xlu0 %v217, 123
    %v303 = vpop.permute.xlu0 %302
    %vm304 = vcmask 1006592
    %v305 = vsel %vm304, %v235, %v237
    %v306 = vsel %vm304, %v237, %v239
    %v307 = vsel %vm304, %v241, %v243
    %v308 = vsel %vm304, %v243, %v239
    %v309 = vsel %vm304, %v245, %v247
    %v310 = vsel %vm304, %v247, %v239
    %v311 = vsel %vm304, %v249, %v251
    %v312 = vsel %vm304, %v251, %v253
    %v313 = vsel %vm304, %v255, %v257
    %v314 = vsel %vm304, %v257, %v253
    %v315 = vsel %vm304, %v259, %v261
    %v316 = vsel %vm304, %v261, %v253
    %v317 = vsel %vm304, %v263, %v265
    %v318 = vsel %vm304, %v265, %v267
    %v319 = vsel %vm304, %v269, %v271
    %v320 = vsel %vm304, %v271, %v267
    %v321 = vsel %vm304, %v273, %v275
    %v322 = vsel %vm304, %v275, %v267
    %v323 = vsel %vm304, %v277, %v279
    %v324 = vsel %vm304, %v279, %v281
    %v325 = vsel %vm304, %v283, %v285
    %v326 = vsel %vm304, %v285, %v281
    %v327 = vsel %vm304, %v287, %v289
    %v328 = vsel %vm304, %v289, %v281
    %v329 = vsel %vm304, %v291, %v293
    %v330 = vsel %vm304, %v293, %v295
    %v331 = vsel %vm304, %v297, %v299
    %v332 = vsel %vm304, %v299, %v295
    %v333 = vsel %vm304, %v301, %v303
    %v334 = vsel %vm304, %v303, %v295
    %vm365 = vcmask 982016
    %v366 = vsel %vm365, %v233, 0
    %368 = vmatpush.msra.mxu0 0.0
    %369 = vmatpush.msra.mxu0 %v333
    %370 = vmatpush.msra.mxu0 %v331
    %371 = vmatpush.msra.mxu0 %v329
    %372 = vmatpush.msra.mxu0 %v327
    %373 = vmatpush.msra.mxu0 %v325
    %374 = vmatpush.msra.mxu0 %v323
    %375 = vmatpush.msra.mxu0 %v321
    %376 = vmatpush.msra.mxu0 %v319
    %377 = vmatpush.msra.mxu0 %v317
    %378 = vmatpush.msra.mxu0 %v315
    %379 = vmatpush.msra.mxu0 %v313
    %380 = vmatpush.msra.mxu0 %v311
    %381 = vmatpush.msra.mxu0 %v309
    %382 = vmatpush.msra.mxu0 %v307
    %383 = vmatpush.msra.mxu0 %v305
    %384 = vmatmul.f32.gmra.mxu0 %v366
    %v385 = vpop.f32.mrf.mxu0
    %v386 = vadd.f32 0.0, %v385
    %387 = vdwg.mxu0
    %388 = vmatpush.msra.mxu0 0.0
    %389 = vmatpush.msra.mxu0 %v334
    %390 = vmatpush.msra.mxu0 %v332
    %391 = vmatpush.msra.mxu0 %v330
    %392 = vmatpush.msra.mxu0 %v328
    %393 = vmatpush.msra.mxu0 %v326
    %394 = vmatpush.msra.mxu0 %v324
    %395 = vmatpush.msra.mxu0 %v322
    %396 = vmatpush.msra.mxu0 %v320
    %397 = vmatpush.msra.mxu0 %v318
    %398 = vmatpush.msra.mxu0 %v316
    %399 = vmatpush.msra.mxu0 %v314
    %400 = vmatpush.msra.mxu0 %v312
    %401 = vmatpush.msra.mxu0 %v310
    %402 = vmatpush.msra.mxu0 %v308
    %403 = vmatpush.msra.mxu0 %v306
    %404 = vmatmul.f32.gmra.mxu0 %v366
    %v405 = vpop.f32.mrf.mxu0
    %v406 = vadd.f32 0.0, %v405
    %407 = vdwg.mxu0
    %v408 = vsel %vm365, %v224, 0
    %410 = vmatpush.msra.mxu0 0.0
    %411 = vmatpush.msra.mxu0 %v216
    %412 = vmatpush.msra.mxu0 %v214
    %413 = vmatpush.msra.mxu0 %v212
    %414 = vmatpush.msra.mxu0 %v189
    %415 = vmatpush.msra.mxu0 %v187
    %416 = vmatpush.msra.mxu0 %v185
    %417 = vmatpush.msra.mxu0 %v162
    %418 = vmatpush.msra.mxu0 %v160
    %419 = vmatpush.msra.mxu0 %v158
    %420 = vmatpush.msra.mxu0 %v135
    %421 = vmatpush.msra.mxu0 %v133
    %422 = vmatpush.msra.mxu0 %v131
    %423 = vmatpush.msra.mxu0 %v81
    %424 = vmatpush.msra.mxu0 %v78
    %425 = vmatpush.msra.mxu0 %v75
    %426 = vmatmul.f32.gmra.mxu0 %v408
    %v427 = vpop.f32.mrf.mxu0
    %v428 = vadd.f32 %v386, %v427
    %429 = vdwg.mxu0
    %430 = vmatpush.msra.mxu0 0.0
    %431 = vmatpush.msra.mxu0 %v217
    %432 = vmatpush.msra.mxu0 %v215
    %433 = vmatpush.msra.mxu0 %v213
    %434 = vmatpush.msra.mxu0 %v190
    %435 = vmatpush.msra.mxu0 %v188
    %436 = vmatpush.msra.mxu0 %v186
    %437 = vmatpush.msra.mxu0 %v163
    %438 = vmatpush.msra.mxu0 %v161
    %439 = vmatpush.msra.mxu0 %v159
    %440 = vmatpush.msra.mxu0 %v136
    %441 = vmatpush.msra.mxu0 %v134
    %442 = vmatpush.msra.mxu0 %v132
    %443 = vmatpush.msra.mxu0 %v107
    %444 = vmatpush.msra.mxu0 %v104
    %445 = vmatpush.msra.mxu0 %v101
    %446 = vmatmul.f32.gmra.mxu0 %v408
    %v447 = vpop.f32.mrf.mxu0
    %v448 = vadd.f32 %v406, %v447
    %449 = vdwg.mxu0
    %v450 = vld [vmem:[%s1 + $0x8] sm:$0xff]
    %v451 = vld [vmem:[%s1 + $0x10] sm:$0xff]
    %454 = vrot.lane.b32.xlu0 %v450, 16
    %v455 = vpop.permute.xlu0 %454
    %456 = vrot.lane.b32.xlu0 %v451, 16
    %v457 = vpop.permute.xlu0 %456
    %vm458 = vcmask 130048
    %v459 = vsel %vm458, %v455, %v457
    %460 = vrot.lane.b32.xlu0 %v75, 118
    %v461 = vpop.permute.xlu0 %460
    %462 = vrot.lane.b32.xlu0 %v101, 118
    %v463 = vpop.permute.xlu0 %462
    %464 = vrot.lane.b32.xlu0 0.0, 118
    %v465 = vpop.permute.xlu0 %464
    %466 = vrot.lane.b32.xlu0 %v78, 118
    %v467 = vpop.permute.xlu0 %466
    %468 = vrot.lane.b32.xlu0 %v104, 118
    %v469 = vpop.permute.xlu0 %468
    %470 = vrot.lane.b32.xlu0 %v81, 118
    %v471 = vpop.permute.xlu0 %470
    %472 = vrot.lane.b32.xlu0 %v107, 118
    %v473 = vpop.permute.xlu0 %472
    %474 = vrot.lane.b32.xlu0 %v131, 118
    %v475 = vpop.permute.xlu0 %474
    %476 = vrot.lane.b32.xlu0 %v132, 118
    %v477 = vpop.permute.xlu0 %476
    %478 = vrot.lane.b32.xlu0 %v121, 118
    %v479 = vpop.permute.xlu0 %478
    %480 = vrot.lane.b32.xlu0 %v133, 118
    %v481 = vpop.permute.xlu0 %480
    %482 = vrot.lane.b32.xlu0 %v134, 118
    %v483 = vpop.permute.xlu0 %482
    %484 = vrot.lane.b32.xlu0 %v135, 118
    %v485 = vpop.permute.xlu0 %484
    %486 = vrot.lane.b32.xlu0 %v136, 118
    %v487 = vpop.permute.xlu0 %486
    %488 = vrot.lane.b32.xlu0 %v158, 118
    %v489 = vpop.permute.xlu0 %488
    %490 = vrot.lane.b32.xlu0 %v159, 118
    %v491 = vpop.permute.xlu0 %490
    %492 = vrot.lane.b32.xlu0 %v148, 118
    %v493 = vpop.permute.xlu0 %492
    %494 = vrot.lane.b32.xlu0 %v160, 118
    %v495 = vpop.permute.xlu0 %494
    %496 = vrot.lane.b32.xlu0 %v161, 118
    %v497 = vpop.permute.xlu0 %496
    %498 = vrot.lane.b32.xlu0 %v162, 118
    %v499 = vpop.permute.xlu0 %498
    %500 = vrot.lane.b32.xlu0 %v163, 118
    %v501 = vpop.permute.xlu0 %500
    %502 = vrot.lane.b32.xlu0 %v185, 118
    %v503 = vpop.permute.xlu0 %502
    %504 = vrot.lane.b32.xlu0 %v186, 118
    %v505 = vpop.permute.xlu0 %504
    %506 = vrot.lane.b32.xlu0 %v175, 118
    %v507 = vpop.permute.xlu0 %506
    %508 = vrot.lane.b32.xlu0 %v187, 118
    %v509 = vpop.permute.xlu0 %508
    %510 = vrot.lane.b32.xlu0 %v188, 118
    %v511 = vpop.permute.xlu0 %510
    %512 = vrot.lane.b32.xlu0 %v189, 118
    %v513 = vpop.permute.xlu0 %512
    %514 = vrot.lane.b32.xlu0 %v190, 118
    %v515 = vpop.permute.xlu0 %514
    %516 = vrot.lane.b32.xlu0 %v212, 118
    %v517 = vpop.permute.xlu0 %516
    %518 = vrot.lane.b32.xlu0 %v213, 118
    %v519 = vpop.permute.xlu0 %518
    %520 = vrot.lane.b32.xlu0 %v202, 118
    %v521 = vpop.permute.xlu0 %520
    %522 = vrot.lane.b32.xlu0 %v214, 118
    %v523 = vpop.permute.xlu0 %522
    %524 = vrot.lane.b32.xlu0 %v215, 118
    %v525 = vpop.permute.xlu0 %524
    %526 = vrot.lane.b32.xlu0 %v216, 118
    %v527 = vpop.permute.xlu0 %526
    %528 = vrot.lane.b32.xlu0 %v217, 118
    %v529 = vpop.permute.xlu0 %528
    %vm530 = vcmask 965632
    %v531 = vsel %vm530, %v461, %v463
    %v532 = vsel %vm530, %v463, %v465
    %v533 = vsel %vm530, %v467, %v469
    %v534 = vsel %vm530, %v469, %v465
    %v535 = vsel %vm530, %v471, %v473
    %v536 = vsel %vm530, %v473, %v465
    %v537 = vsel %vm530, %v475, %v477
    %v538 = vsel %vm530, %v477, %v479
    %v539 = vsel %vm530, %v481, %v483
    %v540 = vsel %vm530, %v483, %v479
    %v541 = vsel %vm530, %v485, %v487
    %v542 = vsel %vm530, %v487, %v479
    %v543 = vsel %vm530, %v489, %v491
    %v544 = vsel %vm530, %v491, %v493
    %v545 = vsel %vm530, %v495, %v497
    %v546 = vsel %vm530, %v497, %v493
    %v547 = vsel %vm530, %v499, %v501
    %v548 = vsel %vm530, %v501, %v493
    %v549 = vsel %vm530, %v503, %v505
    %v550 = vsel %vm530, %v505, %v507
    %v551 = vsel %vm530, %v509, %v511
    %v552 = vsel %vm530, %v511, %v507
    %v553 = vsel %vm530, %v513, %v515
    %v554 = vsel %vm530, %v515, %v507
    %v555 = vsel %vm530, %v517, %v519
    %v556 = vsel %vm530, %v519, %v521
    %v557 = vsel %vm530, %v523, %v525
    %v558 = vsel %vm530, %v525, %v521
    %v559 = vsel %vm530, %v527, %v529
    %v560 = vsel %vm530, %v529, %v521
    %v591 = vsel %vm365, %v459, 0
    %593 = vmatpush.msra.mxu0 0.0
    %594 = vmatpush.msra.mxu0 %v559
    %595 = vmatpush.msra.mxu0 %v557
    %596 = vmatpush.msra.mxu0 %v555
    %597 = vmatpush.msra.mxu0 %v553
    %598 = vmatpush.msra.mxu0 %v551
    %599 = vmatpush.msra.mxu0 %v549
    %600 = vmatpush.msra.mxu0 %v547
    %601 = vmatpush.msra.mxu0 %v545
    %602 = vmatpush.msra.mxu0 %v543
    %603 = vmatpush.msra.mxu0 %v541
    %604 = vmatpush.msra.mxu0 %v539
    %605 = vmatpush.msra.mxu0 %v537
    %606 = vmatpush.msra.mxu0 %v535
    %607 = vmatpush.msra.mxu0 %v533
    %608 = vmatpush.msra.mxu0 %v531
    %609 = vmatmul.f32.gmra.mxu0 %v591
    %v610 = vpop.f32.mrf.mxu0
    %v611 = vadd.f32 0.0, %v610
    %612 = vdwg.mxu0
    %613 = vmatpush.msra.mxu0 0.0
    %614 = vmatpush.msra.mxu0 %v560
    %615 = vmatpush.msra.mxu0 %v558
    %616 = vmatpush.msra.mxu0 %v556
    %617 = vmatpush.msra.mxu0 %v554
    %618 = vmatpush.msra.mxu0 %v552
    %619 = vmatpush.msra.mxu0 %v550
    %620 = vmatpush.msra.mxu0 %v548
    %621 = vmatpush.msra.mxu0 %v546
    %622 = vmatpush.msra.mxu0 %v544
    %623 = vmatpush.msra.mxu0 %v542
    %624 = vmatpush.msra.mxu0 %v540
    %625 = vmatpush.msra.mxu0 %v538
    %626 = vmatpush.msra.mxu0 %v536
    %627 = vmatpush.msra.mxu0 %v534
    %628 = vmatpush.msra.mxu0 %v532
    %629 = vmatmul.f32.gmra.mxu0 %v591
    %v630 = vpop.f32.mrf.mxu0
    %v631 = vadd.f32 0.0, %v630
    %632 = vdwg.mxu0
    %v633 = vadd.f32 %v428, %v611
    %v634 = vadd.f32 %v448, %v631
    %635 = vset.pattern.permute.xlu0 104
    %636 = vperm.xlu0 %635, %v451
    %v637 = vpop.permute.xlu0 %636
    %v639 = vadd.f32 %v633, %v637
    %v640 = vadd.f32 %v634, %v637
    %v641 = vmax.f32 %v639, 0.0
    %v642 = vmax.f32 %v640, 0.0
    %645 = vrot.lane.b32.xlu0 %v641, 127
    %v646 = vpop.permute.xlu0 %645
    %647 = vrot.lane.b32.xlu0 %v642, 127
    %v648 = vpop.permute.xlu0 %647
    %v649 = vsel %vm130, %v646, %v648
    %v650 = vsel %vm130, %v648, %v121
    %653 = vrot.lane.b32.xlu0 %v641, 126
    %v654 = vpop.permute.xlu0 %653
    %655 = vrot.lane.b32.xlu0 %v642, 126
    %v656 = vpop.permute.xlu0 %655
    %v657 = vsel %vm157, %v654, %v656
    %v658 = vsel %vm157, %v656, %v148
    %661 = vrot.lane.b32.xlu0 %v641, 125
    %v662 = vpop.permute.xlu0 %661
    %663 = vrot.lane.b32.xlu0 %v642, 125
    %v664 = vpop.permute.xlu0 %663
    %v665 = vsel %vm184, %v662, %v664
    %v666 = vsel %vm184, %v664, %v175
    %669 = vrot.lane.b32.xlu0 %v641, 124
    %v670 = vpop.permute.xlu0 %669
    %671 = vrot.lane.b32.xlu0 %v642, 124
    %v672 = vpop.permute.xlu0 %671
    %v673 = vsel %vm211, %v670, %v672
    %v674 = vsel %vm211, %v672, %v202
    %677 = vrot.lane.b32.xlu0 %v641, 123
    %v678 = vpop.permute.xlu0 %677
    %679 = vrot.lane.b32.xlu0 %v642, 123
    %v680 = vpop.permute.xlu0 %679
    %v681 = vsel %vm304, %v678, %v680
    %v682 = vsel %vm304, %v680, %v239
    %685 = vrot.lane.b32.xlu0 %v641, 122
    %v686 = vpop.permute.xlu0 %685
    %687 = vrot.lane.b32.xlu0 %v642, 122
    %v688 = vpop.permute.xlu0 %687
    %689 = vrot.lane.b32.xlu0 0.0, 122
    %v690 = vpop.permute.xlu0 %689
    %vm691 = vcmask 998400
    %v692 = vsel %vm691, %v686, %v688
    %v693 = vsel %vm691, %v688, %v690
    %696 = vrot.lane.b32.xlu0 %v641, 121
    %v697 = vpop.permute.xlu0 %696
    %698 = vrot.lane.b32.xlu0 %v642, 121
    %v699 = vpop.permute.xlu0 %698
    %700 = vrot.lane.b32.xlu0 0.0, 121
    %v701 = vpop.permute.xlu0 %700
    %vm702 = vcmask 990208
    %v703 = vsel %vm702, %v697, %v699
    %v704 = vsel %vm702, %v699, %v701
    %707 = vrot.lane.b32.xlu0 %v641, 120
    %v708 = vpop.permute.xlu0 %707
    %709 = vrot.lane.b32.xlu0 %v642, 120
    %v710 = vpop.permute.xlu0 %709
    %711 = vrot.lane.b32.xlu0 0.0, 120
    %v712 = vpop.permute.xlu0 %711
    %v713 = vsel %vm365, %v708, %v710
    %v714 = vsel %vm365, %v710, %v712
    %717 = vrot.lane.b32.xlu0 %v641, 119
    %v718 = vpop.permute.xlu0 %717
    %719 = vrot.lane.b32.xlu0 %v642, 119
    %v720 = vpop.permute.xlu0 %719
    %721 = vrot.lane.b32.xlu0 0.0, 119
    %v722 = vpop.permute.xlu0 %721
    %vm723 = vcmask 973824
    %v724 = vsel %vm723, %v718, %v720
    %v725 = vsel %vm723, %v720, %v722
    %728 = vrot.lane.b32.xlu0 %v641, 118
    %v729 = vpop.permute.xlu0 %728
    %730 = vrot.lane.b32.xlu0 %v642, 118
    %v731 = vpop.permute.xlu0 %730
    %v732 = vsel %vm530, %v729, %v731
    %v733 = vsel %vm530, %v731, %v465
    %736 = vrot.lane.b32.xlu0 %v641, 117
    %v737 = vpop.permute.xlu0 %736
    %738 = vrot.lane.b32.xlu0 %v642, 117
    %v739 = vpop.permute.xlu0 %738
    %740 = vrot.lane.b32.xlu0 0.0, 117
    %v741 = vpop.permute.xlu0 %740
    %vm742 = vcmask 957440
    %v743 = vsel %vm742, %v737, %v739
    %v744 = vsel %vm742, %v739, %v741
    %747 = vrot.lane.b32.xlu0 %v641, 116
    %v748 = vpop.permute.xlu0 %747
    %749 = vrot.lane.b32.xlu0 %v642, 116
    %v750 = vpop.permute.xlu0 %749
    %751 = vrot.lane.b32.xlu0 0.0, 116
    %v752 = vpop.permute.xlu0 %751
    %vm753 = vcmask 949248
    %v754 = vsel %vm753, %v748, %v750
    %v755 = vsel %vm753, %v750, %v752
    %758 = vrot.lane.b32.xlu0 %v641, 115
    %v759 = vpop.permute.xlu0 %758
    %760 = vrot.lane.b32.xlu0 %v642, 115
    %v761 = vpop.permute.xlu0 %760
    %762 = vrot.lane.b32.xlu0 0.0, 115
    %v763 = vpop.permute.xlu0 %762
    %vm764 = vcmask 941056
    %v765 = vsel %vm764, %v759, %v761
    %v766 = vsel %vm764, %v761, %v763
    %769 = vrot.lane.b32.xlu0 %v641, 114
    %v770 = vpop.permute.xlu0 %769
    %771 = vrot.lane.b32.xlu0 %v642, 114
    %v772 = vpop.permute.xlu0 %771
    %773 = vrot.lane.b32.xlu0 0.0, 114
    %v774 = vpop.permute.xlu0 %773
    %vm775 = vcmask 932864
    %v776 = vsel %vm775, %v770, %v772
    %v777 = vsel %vm775, %v772, %v774
    %v780 = vld [vmem:[%s1 + $0x18] sm:$0xff]
    %782 = vset.pattern.permute.xlu0 120
    %783 = vperm.xlu0 %782, %v780
    %v784 = vpop.permute.xlu0 %783
    %v786 = vsel %vm365, %v780, 0
    %788 = vmatpush.msra.mxu0 0.0
    %789 = vmatpush.msra.mxu0 %v776
    %790 = vmatpush.msra.mxu0 %v765
    %791 = vmatpush.msra.mxu0 %v754
    %792 = vmatpush.msra.mxu0 %v743
    %793 = vmatpush.msra.mxu0 %v732
    %794 = vmatpush.msra.mxu0 %v724
    %795 = vmatpush.msra.mxu0 %v713
    %796 = vmatpush.msra.mxu0 %v703
    %797 = vmatpush.msra.mxu0 %v692
    %798 = vmatpush.msra.mxu0 %v681
    %799 = vmatpush.msra.mxu0 %v673
    %800 = vmatpush.msra.mxu0 %v665
    %801 = vmatpush.msra.mxu0 %v657
    %802 = vmatpush.msra.mxu0 %v649
    %803 = vmatpush.msra.mxu0 %v641
    %804 = vmatmul.f32.gmra.mxu0 %v786
    %v805 = vpop.f32.mrf.mxu0
    %v806 = vadd.f32 %v784, %v805
    %807 = vdwg.mxu0
    %808 = vmatpush.msra.mxu0 0.0
    %809 = vmatpush.msra.mxu0 %v777
    %810 = vmatpush.msra.mxu0 %v766
    %811 = vmatpush.msra.mxu0 %v755
    %812 = vmatpush.msra.mxu0 %v744
    %813 = vmatpush.msra.mxu0 %v733
    %814 = vmatpush.msra.mxu0 %v725
    %815 = vmatpush.msra.mxu0 %v714
    %816 = vmatpush.msra.mxu0 %v704
    %817 = vmatpush.msra.mxu0 %v693
    %818 = vmatpush.msra.mxu0 %v682
    %819 = vmatpush.msra.mxu0 %v674
    %820 = vmatpush.msra.mxu0 %v666
    %821 = vmatpush.msra.mxu0 %v658
    %822 = vmatpush.msra.mxu0 %v650
    %823 = vmatpush.msra.mxu0 %v642
    %824 = vmatmul.f32.gmra.mxu0 %v786
    %v825 = vpop.f32.mrf.mxu0
    %v826 = vadd.f32 %v784, %v825
    %827 = vdwg.mxu0
    %v828 = vmax.f32 %v806, 0.0
    %v829 = vmax.f32 %v826, 0.0
    %832 = vrot.lane.b32.xlu0 %v828, 127
    %v833 = vpop.permute.xlu0 %832
    %834 = vrot.lane.b32.xlu0 %v829, 127
    %v835 = vpop.permute.xlu0 %834
    %v836 = vsel %vm130, %v833, %v835
    %v837 = vsel %vm130, %v835, %v121
    %840 = vrot.lane.b32.xlu0 %v828, 126
    %v841 = vpop.permute.xlu0 %840
    %842 = vrot.lane.b32.xlu0 %v829, 126
    %v843 = vpop.permute.xlu0 %842
    %v844 = vsel %vm157, %v841, %v843
    %v845 = vsel %vm157, %v843, %v148
    %848 = vrot.lane.b32.xlu0 %v828, 125
    %v849 = vpop.permute.xlu0 %848
    %850 = vrot.lane.b32.xlu0 %v829, 125
    %v851 = vpop.permute.xlu0 %850
    %v852 = vsel %vm184, %v849, %v851
    %v853 = vsel %vm184, %v851, %v175
    %856 = vrot.lane.b32.xlu0 %v828, 124
    %v857 = vpop.permute.xlu0 %856
    %858 = vrot.lane.b32.xlu0 %v829, 124
    %v859 = vpop.permute.xlu0 %858
    %v860 = vsel %vm211, %v857, %v859
    %v861 = vsel %vm211, %v859, %v202
    %864 = vrot.lane.b32.xlu0 %v828, 123
    %v865 = vpop.permute.xlu0 %864
    %866 = vrot.lane.b32.xlu0 %v829, 123
    %v867 = vpop.permute.xlu0 %866
    %v868 = vsel %vm304, %v865, %v867
    %v869 = vsel %vm304, %v867, %v239
    %872 = vrot.lane.b32.xlu0 %v828, 122
    %v873 = vpop.permute.xlu0 %872
    %874 = vrot.lane.b32.xlu0 %v829, 122
    %v875 = vpop.permute.xlu0 %874
    %v876 = vsel %vm691, %v873, %v875
    %v877 = vsel %vm691, %v875, %v690
    %880 = vrot.lane.b32.xlu0 %v828, 121
    %v881 = vpop.permute.xlu0 %880
    %882 = vrot.lane.b32.xlu0 %v829, 121
    %v883 = vpop.permute.xlu0 %882
    %v884 = vsel %vm702, %v881, %v883
    %v885 = vsel %vm702, %v883, %v701
    %888 = vrot.lane.b32.xlu0 %v828, 120
    %v889 = vpop.permute.xlu0 %888
    %890 = vrot.lane.b32.xlu0 %v829, 120
    %v891 = vpop.permute.xlu0 %890
    %v892 = vsel %vm365, %v889, %v891
    %v893 = vsel %vm365, %v891, %v712
    %896 = vrot.lane.b32.xlu0 %v828, 119
    %v897 = vpop.permute.xlu0 %896
    %898 = vrot.lane.b32.xlu0 %v829, 119
    %v899 = vpop.permute.xlu0 %898
    %v900 = vsel %vm723, %v897, %v899
    %v901 = vsel %vm723, %v899, %v722
    %904 = vrot.lane.b32.xlu0 %v828, 118
    %v905 = vpop.permute.xlu0 %904
    %906 = vrot.lane.b32.xlu0 %v829, 118
    %v907 = vpop.permute.xlu0 %906
    %v908 = vsel %vm530, %v905, %v907
    %v909 = vsel %vm530, %v907, %v465
    %912 = vrot.lane.b32.xlu0 %v828, 117
    %v913 = vpop.permute.xlu0 %912
    %914 = vrot.lane.b32.xlu0 %v829, 117
    %v915 = vpop.permute.xlu0 %914
    %v916 = vsel %vm742, %v913, %v915
    %v917 = vsel %vm742, %v915, %v741
    %920 = vrot.lane.b32.xlu0 %v828, 116
    %v921 = vpop.permute.xlu0 %920
    %922 = vrot.lane.b32.xlu0 %v829, 116
    %v923 = vpop.permute.xlu0 %922
    %v924 = vsel %vm753, %v921, %v923
    %v925 = vsel %vm753, %v923, %v752
    %928 = vrot.lane.b32.xlu0 %v828, 115
    %v929 = vpop.permute.xlu0 %928
    %930 = vrot.lane.b32.xlu0 %v829, 115
    %v931 = vpop.permute.xlu0 %930
    %v932 = vsel %vm764, %v929, %v931
    %v933 = vsel %vm764, %v931, %v763
    %936 = vrot.lane.b32.xlu0 %v828, 114
    %v937 = vpop.permute.xlu0 %936
    %938 = vrot.lane.b32.xlu0 %v829, 114
    %v939 = vpop.permute.xlu0 %938
    %v940 = vsel %vm775, %v937, %v939
    %v941 = vsel %vm775, %v939, %v774
    %v944 = vld [vmem:[%s1 + $0x30] sm:$0xff]
    %946 = vset.pattern.permute.xlu0 120
    %947 = vperm.xlu0 %946, %v944
    %v948 = vpop.permute.xlu0 %947
    %v950 = vsel %vm365, %v944, 0
    %952 = vmatpush.msra.mxu0 0.0
    %953 = vmatpush.msra.mxu0 %v940
    %954 = vmatpush.msra.mxu0 %v932
    %955 = vmatpush.msra.mxu0 %v924
    %956 = vmatpush.msra.mxu0 %v916
    %957 = vmatpush.msra.mxu0 %v908
    %958 = vmatpush.msra.mxu0 %v900
    %959 = vmatpush.msra.mxu0 %v892
    %960 = vmatpush.msra.mxu0 %v884
    %961 = vmatpush.msra.mxu0 %v876
    %962 = vmatpush.msra.mxu0 %v868
    %963 = vmatpush.msra.mxu0 %v860
    %964 = vmatpush.msra.mxu0 %v852
    %965 = vmatpush.msra.mxu0 %v844
    %966 = vmatpush.msra.mxu0 %v836
    %967 = vmatpush.msra.mxu0 %v828
    %968 = vmatmul.f32.gmra.mxu0 %v950
    %v969 = vpop.f32.mrf.mxu0
    %v970 = vadd.f32 %v948, %v969
    %971 = vdwg.mxu0
    %972 = vmatpush.msra.mxu0 0.0
    %973 = vmatpush.msra.mxu0 %v941
    %974 = vmatpush.msra.mxu0 %v933
    %975 = vmatpush.msra.mxu0 %v925
    %976 = vmatpush.msra.mxu0 %v917
    %977 = vmatpush.msra.mxu0 %v909
    %978 = vmatpush.msra.mxu0 %v901
    %979 = vmatpush.msra.mxu0 %v893
    %980 = vmatpush.msra.mxu0 %v885
    %981 = vmatpush.msra.mxu0 %v877
    %982 = vmatpush.msra.mxu0 %v869
    %983 = vmatpush.msra.mxu0 %v861
    %984 = vmatpush.msra.mxu0 %v853
    %985 = vmatpush.msra.mxu0 %v845
    %986 = vmatpush.msra.mxu0 %v837
    %987 = vmatpush.msra.mxu0 %v829
    %988 = vmatmul.f32.gmra.mxu0 %v950
    %v989 = vpop.f32.mrf.mxu0
    %v990 = vadd.f32 %v948, %v989
    %991 = vdwg.mxu0
    %v992 = vmax.f32 %v970, 0.0
    %v993 = vmax.f32 %v990, 0.0
    %996 = vrot.lane.b32.xlu0 %v992, 127
    %v997 = vpop.permute.xlu0 %996
    %998 = vrot.lane.b32.xlu0 %v993, 127
    %v999 = vpop.permute.xlu0 %998
    %v1000 = vsel %vm130, %v997, %v999
    %v1001 = vsel %vm130, %v999, %v121
    %1004 = vrot.lane.b32.xlu0 %v992, 126
    %v1005 = vpop.permute.xlu0 %1004
    %1006 = vrot.lane.b32.xlu0 %v993, 126
    %v1007 = vpop.permute.xlu0 %1006
    %v1008 = vsel %vm157, %v1005, %v1007
    %v1009 = vsel %vm157, %v1007, %v148
    %1012 = vrot.lane.b32.xlu0 %v992, 125
    %v1013 = vpop.permute.xlu0 %1012
    %1014 = vrot.lane.b32.xlu0 %v993, 125
    %v1015 = vpop.permute.xlu0 %1014
    %v1016 = vsel %vm184, %v1013, %v1015
    %v1017 = vsel %vm184, %v1015, %v175
    %1020 = vrot.lane.b32.xlu0 %v992, 124
    %v1021 = vpop.permute.xlu0 %1020
    %1022 = vrot.lane.b32.xlu0 %v993, 124
    %v1023 = vpop.permute.xlu0 %1022
    %v1024 = vsel %vm211, %v1021, %v1023
    %v1025 = vsel %vm211, %v1023, %v202
    %1028 = vrot.lane.b32.xlu0 %v992, 123
    %v1029 = vpop.permute.xlu0 %1028
    %1030 = vrot.lane.b32.xlu0 %v993, 123
    %v1031 = vpop.permute.xlu0 %1030
    %v1032 = vsel %vm304, %v1029, %v1031
    %v1033 = vsel %vm304, %v1031, %v239
    %1036 = vrot.lane.b32.xlu0 %v992, 122
    %v1037 = vpop.permute.xlu0 %1036
    %1038 = vrot.lane.b32.xlu0 %v993, 122
    %v1039 = vpop.permute.xlu0 %1038
    %v1040 = vsel %vm691, %v1037, %v1039
    %v1041 = vsel %vm691, %v1039, %v690
    %1044 = vrot.lane.b32.xlu0 %v992, 121
    %v1045 = vpop.permute.xlu0 %1044
    %1046 = vrot.lane.b32.xlu0 %v993, 121
    %v1047 = vpop.permute.xlu0 %1046
    %v1048 = vsel %vm702, %v1045, %v1047
    %v1049 = vsel %vm702, %v1047, %v701
    %1052 = vrot.lane.b32.xlu0 %v992, 120
    %v1053 = vpop.permute.xlu0 %1052
    %1054 = vrot.lane.b32.xlu0 %v993, 120
    %v1055 = vpop.permute.xlu0 %1054
    %v1056 = vsel %vm365, %v1053, %v1055
    %v1057 = vsel %vm365, %v1055, %v712
    %1060 = vrot.lane.b32.xlu0 %v992, 119
    %v1061 = vpop.permute.xlu0 %1060
    %1062 = vrot.lane.b32.xlu0 %v993, 119
    %v1063 = vpop.permute.xlu0 %1062
    %v1064 = vsel %vm723, %v1061, %v1063
    %v1065 = vsel %vm723, %v1063, %v722
    %1068 = vrot.lane.b32.xlu0 %v992, 118
    %v1069 = vpop.permute.xlu0 %1068
    %1070 = vrot.lane.b32.xlu0 %v993, 118
    %v1071 = vpop.permute.xlu0 %1070
    %v1072 = vsel %vm530, %v1069, %v1071
    %v1073 = vsel %vm530, %v1071, %v465
    %1076 = vrot.lane.b32.xlu0 %v992, 117
    %v1077 = vpop.permute.xlu0 %1076
    %1078 = vrot.lane.b32.xlu0 %v993, 117
    %v1079 = vpop.permute.xlu0 %1078
    %v1080 = vsel %vm742, %v1077, %v1079
    %v1081 = vsel %vm742, %v1079, %v741
    %1084 = vrot.lane.b32.xlu0 %v992, 116
    %v1085 = vpop.permute.xlu0 %1084
    %1086 = vrot.lane.b32.xlu0 %v993, 116
    %v1087 = vpop.permute.xlu0 %1086
    %v1088 = vsel %vm753, %v1085, %v1087
    %v1089 = vsel %vm753, %v1087, %v752
    %1092 = vrot.lane.b32.xlu0 %v992, 115
    %v1093 = vpop.permute.xlu0 %1092
    %1094 = vrot.lane.b32.xlu0 %v993, 115
    %v1095 = vpop.permute.xlu0 %1094
    %v1096 = vsel %vm764, %v1093, %v1095
    %v1097 = vsel %vm764, %v1095, %v763
    %1100 = vrot.lane.b32.xlu0 %v992, 114
    %v1101 = vpop.permute.xlu0 %1100
    %1102 = vrot.lane.b32.xlu0 %v993, 114
    %v1103 = vpop.permute.xlu0 %1102
    %v1104 = vsel %vm775, %v1101, %v1103
    %v1105 = vsel %vm775, %v1103, %v774
    %v1108 = vld [vmem:[%s1 + $0x48] sm:$0xff]
    %1110 = vset.pattern.permute.xlu0 120
    %1111 = vperm.xlu0 %1110, %v1108
    %v1112 = vpop.permute.xlu0 %1111
    %v1114 = vsel %vm365, %v1108, 0
    %1116 = vmatpush.msra.mxu0 0.0
    %1117 = vmatpush.msra.mxu0 %v1104
    %1118 = vmatpush.msra.mxu0 %v1096
    %1119 = vmatpush.msra.mxu0 %v1088
    %1120 = vmatpush.msra.mxu0 %v1080
    %1121 = vmatpush.msra.mxu0 %v1072
    %1122 = vmatpush.msra.mxu0 %v1064
    %1123 = vmatpush.msra.mxu0 %v1056
    %1124 = vmatpush.msra.mxu0 %v1048
    %1125 = vmatpush.msra.mxu0 %v1040
    %1126 = vmatpush.msra.mxu0 %v1032
    %1127 = vmatpush.msra.mxu0 %v1024
    %1128 = vmatpush.msra.mxu0 %v1016
    %1129 = vmatpush.msra.mxu0 %v1008
    %1130 = vmatpush.msra.mxu0 %v1000
    %1131 = vmatpush.msra.mxu0 %v992
    %1132 = vmatmul.f32.gmra.mxu0 %v1114
    %v1133 = vpop.f32.mrf.mxu0
    %v1134 = vadd.f32 %v1112, %v1133
    %1135 = vdwg.mxu0
    %1136 = vmatpush.msra.mxu0 0.0
    %1137 = vmatpush.msra.mxu0 %v1105
    %1138 = vmatpush.msra.mxu0 %v1097
    %1139 = vmatpush.msra.mxu0 %v1089
    %1140 = vmatpush.msra.mxu0 %v1081
    %1141 = vmatpush.msra.mxu0 %v1073
    %1142 = vmatpush.msra.mxu0 %v1065
    %1143 = vmatpush.msra.mxu0 %v1057
    %1144 = vmatpush.msra.mxu0 %v1049
    %1145 = vmatpush.msra.mxu0 %v1041
    %1146 = vmatpush.msra.mxu0 %v1033
    %1147 = vmatpush.msra.mxu0 %v1025
    %1148 = vmatpush.msra.mxu0 %v1017
    %1149 = vmatpush.msra.mxu0 %v1009
    %1150 = vmatpush.msra.mxu0 %v1001
    %1151 = vmatpush.msra.mxu0 %v993
    %1152 = vmatmul.f32.gmra.mxu0 %v1114
    %v1153 = vpop.f32.mrf.mxu0
    %v1154 = vadd.f32 %v1112, %v1153
    %1155 = vdwg.mxu0
    %v1156 = vmax.f32 %v1134, 0.0
    %v1157 = vmax.f32 %v1154, 0.0
    %1160 = vrot.lane.b32.xlu0 %v1156, 112
    %v1161 = vpop.permute.xlu0 %1160
    %1162 = vrot.lane.b32.xlu0 %v1157, 112
    %v1163 = vpop.permute.xlu0 %1162
    %1164 = vrot.lane.b32.xlu0 0.0, 112
    %v1165 = vpop.permute.xlu0 %1164
    %vm1166 = vcmask 916480
    %v1167 = vsel %vm1166, %v1161, %v1163
    %v1168 = vsel %vm1166, %v1163, %v1165
    %1169 = vrot.lane.b32.xlu0 %v1156, 96
    %v1170 = vpop.permute.xlu0 %1169
    %1171 = vrot.lane.b32.xlu0 %v1157, 96
    %v1172 = vpop.permute.xlu0 %1171
    %1173 = vrot.lane.b32.xlu0 0.0, 96
    %v1174 = vpop.permute.xlu0 %1173
    %vm1175 = vcmask 785408
    %v1176 = vsel %vm1175, %v1170, %v1172
    %v1177 = vsel %vm1175, %v1172, %v1174
    %1178 = vrot.lane.b32.xlu0 %v1156, 80
    %v1179 = vpop.permute.xlu0 %1178
    %1180 = vrot.lane.b32.xlu0 %v1157, 80
    %v1181 = vpop.permute.xlu0 %1180
    %1182 = vrot.lane.b32.xlu0 0.0, 80
    %v1183 = vpop.permute.xlu0 %1182
    %vm1184 = vcmask 654336
    %v1185 = vsel %vm1184, %v1179, %v1181
    %v1186 = vsel %vm1184, %v1181, %v1183
    %v1187 = vld [vmem:[%s1 + $0xd8] sm:$0xff]
    %v1188 = vld [vmem:[%s1 + $0xf0] sm:$0xff]
    %1189 = vrot.lane.b32.xlu0 %v1156, 127
    %v1190 = vpop.permute.xlu0 %1189
    %1191 = vrot.lane.b32.xlu0 %v1157, 127
    %v1192 = vpop.permute.xlu0 %1191
    %1193 = vrot.lane.b32.xlu0 %v1167, 127
    %v1194 = vpop.permute.xlu0 %1193
    %1195 = vrot.lane.b32.xlu0 %v1168, 127
    %v1196 = vpop.permute.xlu0 %1195
    %1197 = vrot.lane.b32.xlu0 %v1165, 127
    %v1198 = vpop.permute.xlu0 %1197
    %1199 = vrot.lane.b32.xlu0 %v1176, 127
    %v1200 = vpop.permute.xlu0 %1199
    %1201 = vrot.lane.b32.xlu0 %v1177, 127
    %v1202 = vpop.permute.xlu0 %1201
    %1203 = vrot.lane.b32.xlu0 %v1174, 127
    %v1204 = vpop.permute.xlu0 %1203
    %1205 = vrot.lane.b32.xlu0 %v1185, 127
    %v1206 = vpop.permute.xlu0 %1205
    %1207 = vrot.lane.b32.xlu0 %v1186, 127
    %v1208 = vpop.permute.xlu0 %1207
    %1209 = vrot.lane.b32.xlu0 %v1183, 127
    %v1210 = vpop.permute.xlu0 %1209
    %v1211 = vsel %vm130, %v1190, %v1192
    %v1212 = vsel %vm130, %v1192, %v121
    %v1213 = vsel %vm130, %v1194, %v1196
    %v1214 = vsel %vm130, %v1196, %v1198
    %v1215 = vsel %vm130, %v1200, %v1202
    %v1216 = vsel %vm130, %v1202, %v1204
    %v1217 = vsel %vm130, %v1206, %v1208
    %v1218 = vsel %vm130, %v1208, %v1210
    %v1228 = vsel %vm47, %v1187, 0
    %v1231 = vsel %vm47, %v1188, 0
    %1233 = vmatpush.msra.mxu0 0.0
    %1234 = vmatpush.msra.mxu0 0.0
    %1235 = vmatpush.msra.mxu0 0.0
    %1236 = vmatpush.msra.mxu0 0.0
    %1237 = vmatpush.msra.mxu0 0.0
    %1238 = vmatpush.msra.mxu0 0.0
    %1239 = vmatpush.msra.mxu0 0.0
    %1240 = vmatpush.msra.mxu0 0.0
    %1241 = vmatpush.msra.mxu0 0.0
    %1242 = vmatpush.msra.mxu0 0.0
    %1243 = vmatpush.msra.mxu0 0.0
    %1244 = vmatpush.msra.mxu0 0.0
    %1245 = vmatpush.msra.mxu0 %v1217
    %1246 = vmatpush.msra.mxu0 %v1215
    %1247 = vmatpush.msra.mxu0 %v1213
    %1248 = vmatpush.msra.mxu0 %v1211
    %1249 = vmatmul.f32.gmra.mxu0 %v1228
    %v1250 = vpop.f32.mrf.mxu0
    %v1251 = vadd.f32 0.0, %v1250
    %1252 = vmatmul.f32.gmra.mxu0 %v1231
    %v1253 = vpop.f32.mrf.mxu0
    %v1254 = vadd.f32 0.0, %v1253
    %1255 = vdwg.mxu0
    %1256 = vmatpush.msra.mxu0 0.0
    %1257 = vmatpush.msra.mxu0 0.0
    %1258 = vmatpush.msra.mxu0 0.0
    %1259 = vmatpush.msra.mxu0 0.0
    %1260 = vmatpush.msra.mxu0 0.0
    %1261 = vmatpush.msra.mxu0 0.0
    %1262 = vmatpush.msra.mxu0 0.0
    %1263 = vmatpush.msra.mxu0 0.0
    %1264 = vmatpush.msra.mxu0 0.0
    %1265 = vmatpush.msra.mxu0 0.0
    %1266 = vmatpush.msra.mxu0 0.0
    %1267 = vmatpush.msra.mxu0 0.0
    %1268 = vmatpush.msra.mxu0 %v1218
    %1269 = vmatpush.msra.mxu0 %v1216
    %1270 = vmatpush.msra.mxu0 %v1214
    %1271 = vmatpush.msra.mxu0 %v1212
    %1272 = vmatmul.f32.gmra.mxu0 %v1228
    %v1273 = vpop.f32.mrf.mxu0
    %v1274 = vadd.f32 0.0, %v1273
    %1275 = vmatmul.f32.gmra.mxu0 %v1231
    %v1276 = vpop.f32.mrf.mxu0
    %v1277 = vadd.f32 0.0, %v1276
    %1278 = vdwg.mxu0
    %v1279 = vld [vmem:[%s1 + $0xa8] sm:$0xff]
    %v1280 = vld [vmem:[%s1 + $0xc0] sm:$0xff]
    %v1282 = vsel %vm458, %v1279, 0
    %v1285 = vsel %vm458, %v1280, 0
    %1287 = vmatpush.msra.mxu0 0.0
    %1288 = vmatpush.msra.mxu0 0.0
    %1289 = vmatpush.msra.mxu0 0.0
    %1290 = vmatpush.msra.mxu0 0.0
    %1291 = vmatpush.msra.mxu0 0.0
    %1292 = vmatpush.msra.mxu0 0.0
    %1293 = vmatpush.msra.mxu0 0.0
    %1294 = vmatpush.msra.mxu0 0.0
    %1295 = vmatpush.msra.mxu0 0.0
    %1296 = vmatpush.msra.mxu0 0.0
    %1297 = vmatpush.msra.mxu0 0.0
    %1298 = vmatpush.msra.mxu0 0.0
    %1299 = vmatpush.msra.mxu0 0.0
    %1300 = vmatpush.msra.mxu0 0.0
    %1301 = vmatpush.msra.mxu0 %v1254
    %1302 = vmatpush.msra.mxu0 %v1251
    %1303 = vmatmul.f32.gmra.mxu0 %v1282
    %v1304 = vpop.f32.mrf.mxu0
    %v1305 = vadd.f32 0.0, %v1304
    %1306 = vmatmul.f32.gmra.mxu0 %v1285
    %v1307 = vpop.f32.mrf.mxu0
    %v1308 = vadd.f32 0.0, %v1307
    %1309 = vdwg.mxu0
    %1310 = vmatpush.msra.mxu0 0.0
    %1311 = vmatpush.msra.mxu0 0.0
    %1312 = vmatpush.msra.mxu0 0.0
    %1313 = vmatpush.msra.mxu0 0.0
    %1314 = vmatpush.msra.mxu0 0.0
    %1315 = vmatpush.msra.mxu0 0.0
    %1316 = vmatpush.msra.mxu0 0.0
    %1317 = vmatpush.msra.mxu0 0.0
    %1318 = vmatpush.msra.mxu0 0.0
    %1319 = vmatpush.msra.mxu0 0.0
    %1320 = vmatpush.msra.mxu0 0.0
    %1321 = vmatpush.msra.mxu0 0.0
    %1322 = vmatpush.msra.mxu0 0.0
    %1323 = vmatpush.msra.mxu0 0.0
    %1324 = vmatpush.msra.mxu0 %v1277
    %1325 = vmatpush.msra.mxu0 %v1274
    %1326 = vmatmul.f32.gmra.mxu0 %v1282
    %v1327 = vpop.f32.mrf.mxu0
    %v1328 = vadd.f32 0.0, %v1327
    %1329 = vmatmul.f32.gmra.mxu0 %v1285
    %v1330 = vpop.f32.mrf.mxu0
    %v1331 = vadd.f32 0.0, %v1330
    %1332 = vdwg.mxu0
    %v1333 = vtanh.pop %v1305
    %v1334 = vtanh.pop %v1328
    %v1335 = vtanh.pop %v1308
    %v1336 = vtanh.pop %v1331
    %1337 = vset.pattern.permute.xlu0 16
    %1338 = vperm.xlu0 %1337, %v1279
    %v1339 = vpop.permute.xlu0 %1338
    %1341 = vset.pattern.permute.xlu0 16
    %1342 = vperm.xlu0 %1341, %v1280
    %v1343 = vpop.permute.xlu0 %1342
    %v1345 = vmul.f32 %v1339, %v1333
    %v1346 = vmul.f32 %v1339, %v1334
    %v1347 = vmul.f32 %v1343, %v1335
    %v1348 = vmul.f32 %v1343, %v1336
    %v1349 = vadd.f32 %v1345, %v1347
    %v1350 = vrot.slane %v1349, 4
    %v1351 = vadd.f32 %v1349, %v1350
    %v1352 = vrot.slane %v1351, 2
    %v1353 = vadd.f32 %v1351, %v1352
    %v1354 = vrot.slane %v1353, 1
    %v1355 = vadd.f32 %v1353, %v1354
    %v1356 = vadd.f32 %v1346, %v1348
    %v1357 = vrot.slane %v1356, 4
    %v1358 = vadd.f32 %v1356, %v1357
    %v1359 = vrot.slane %v1358, 2
    %v1360 = vadd.f32 %v1358, %v1359
    %v1361 = vrot.slane %v1360, 1
    %v1362 = vadd.f32 %v1360, %v1361
    %v1363 = vlaneseq
    %v1364 = vand.u32 %v1363, 127
    %v1365 = vadd.s32 %v1364, 128
    %v1366 = vmul.u32 %v17, 128
    %vm1367 = vcmp.ge.s32.totalorder %v1364, %v1366
    %vm1368 = vcmp.ge.s32.totalorder %v1365, %v1366
    %v1369 = vadd.s32 %v1366, 16
    %vm1370 = vcmp.lt.s32.totalorder %v1364, %v1369
    %vm1371 = vcmp.lt.s32.totalorder %v1365, %v1369
    %vm1372 = vmand %vm1367, %vm1370
    %vm1373 = vmand %vm1368, %vm1371
    %v1374 = vsel %vm1372, %v1355, -1e+30
    %v1375 = vsel %vm1373, %v1362, -1e+30
    %vm1376 = vcmask 1041408
    %v1377 = vsel %vm1376, %v1374, -inf
    %v1378 = vsel %vm1376, %v1375, -inf
    %v1379 = vmax.f32 %v1377, %v1378
    %1380 = vmax.xlane.f32.xlu0 %v1379
    %v1381 = vpop.xlane.xlu0 %1380
    %v1382 = vsub.f32 %v1374, %v1381
    %v1383 = vsub.f32 %v1375, %v1381
    %v1384 = vmul.f32 %v1382, 1.442695
    %v1385 = vpow.pop %v1384
    %v1386 = vmul.f32 %v1383, 1.442695
    %v1387 = vpow.pop %v1386
    %v1388 = vsel %vm1376, %v1385, 0.0
    %v1389 = vsel %vm1376, %v1387, 0.0
    %v1390 = vadd.f32 %v1388, %v1389
    %1391 = vadd.xlane.f32.xlu0 %v1390
    %v1392 = vpop.xlane.xlu0 %1391
    %v1393 = vrcp.pop %v1392
    %v1394 = vmul.f32 %v1392, %v1393
    %v1395 = vsub.f32 1.0, %v1394
    %v1396 = vmul.f32 %v1393, %v1395
    %v1397 = vadd.f32 %v1393, %v1396
    %vm1398 = vweird.f32 %v1392
    %vm1399 = vweird.f32 %v1393
    %vm1400 = vmor %vm1398, %vm1399
    %v1401 = vsel %vm1400, %v1393, %v1397
    %v1402 = vand.u32 2147483647, %v1392
    %vm1403 = vcmp.eq.f32.partialorder %v1402, 8.507059e+37
    %v1404 = vand.u32 %v1392, 2147483648
    %v1405 = vor.u32 1.1754944e-38, %v1404
    %v1406 = vsel %vm1403, %v1405, %v1401
    %v1407 = vmul.f32 %v1385, %v1406
    %v1408 = vmul.f32 %v1387, %v1406
    %1409 = vmatpush.xpose.msra.mxu0 0.0
    %1410 = vmatpush.xpose.msra.mxu0 0.0
    %1411 = vmatpush.xpose.msra.mxu0 0.0
    %1412 = vmatpush.xpose.msra.mxu0 0.0
    %1413 = vmatpush.xpose.msra.mxu0 0.0
    %1414 = vmatpush.xpose.msra.mxu0 0.0
    %1415 = vmatpush.xpose.msra.mxu0 0.0
    %1416 = vmatpush.xpose.msra.mxu0 0.0
    %1417 = vmatpush.xpose.msra.mxu0 0.0
    %1418 = vmatpush.xpose.msra.mxu0 0.0
    %1419 = vmatpush.xpose.msra.mxu0 0.0
    %1420 = vmatpush.xpose.msra.mxu0 0.0
    %1421 = vmatpush.xpose.msra.mxu0 0.0
    %1422 = vmatpush.xpose.msra.mxu0 0.0
    %1423 = vmatpush.xpose.msra.mxu0 %v1254
    %1424 = vmatpush.xpose.msra.mxu0 %v1251
    %1425 = vmatmul.f32.gmra.mxu0 %v1407
    %v1426 = vpop.f32.mrf.mxu0
    %v1427 = vadd.f32 0.0, %v1426
    %1428 = vdwg.mxu0
    %1429 = vmatpush.xpose.msra.mxu0 0.0
    %1430 = vmatpush.xpose.msra.mxu0 0.0
    %1431 = vmatpush.xpose.msra.mxu0 0.0
    %1432 = vmatpush.xpose.msra.mxu0 0.0
    %1433 = vmatpush.xpose.msra.mxu0 0.0
    %1434 = vmatpush.xpose.msra.mxu0 0.0
    %1435 = vmatpush.xpose.msra.mxu0 0.0
    %1436 = vmatpush.xpose.msra.mxu0 0.0
    %1437 = vmatpush.xpose.msra.mxu0 0.0
    %1438 = vmatpush.xpose.msra.mxu0 0.0
    %1439 = vmatpush.xpose.msra.mxu0 0.0
    %1440 = vmatpush.xpose.msra.mxu0 0.0
    %1441 = vmatpush.xpose.msra.mxu0 0.0
    %1442 = vmatpush.xpose.msra.mxu0 0.0
    %1443 = vmatpush.xpose.msra.mxu0 %v1277
    %1444 = vmatpush.xpose.msra.mxu0 %v1274
    %1445 = vmatmul.f32.gmra.mxu0 %v1408
    %v1446 = vpop.f32.mrf.mxu0
    %v1447 = vadd.f32 %v1427, %v1446
    %1448 = vdwg.mxu0
    %vm1449 = vcmask 123904
    %1450 = vst.msk [vmem:[#allocation2] sm:$0x3] %vm1449, %v1447
    // Predicated region
    $region10: #{dingo_forward.1} parent=1 // pred_check
      _
    $region11: #{dingo_forward.1} parent=1 // pred_check_branch
      %1452 = sbr.rel (0) target = $region13
    $region12: #{dingo_forward.1} parent=1 // pred_region
      %1454 = vsyncadd [#allocation3], 0
      %s1456 = sshll.u32 [#allocation2], 4
      %s1457 = int_to_ptr.vmem [resolvable:$true] %s1456
      %s1458 = sshll.u32 %s2, 4
      %s1459 = int_to_ptr.hbm [resolvable:$true] %s1458
      %1461 = dma.vmem_to_hbm [thread:$0]  %s1457, 32, %s1459, [#allocation3]
    $region13: #{dingo_forward.1} parent=1 // pred_fallthru
      _
    // Predicated region
    $region14: #{dingo_forward.1} parent=1 // pred_check
      _
    $region15: #{dingo_forward.1} parent=1 // pred_check_branch
      %1463 = sbr.rel (0) target = $region17
    $region16: #{dingo_forward.1} parent=1 // pred_region
      %1465 = dma.done [#allocation3], 32
    $region17: #{dingo_forward.1} parent=1 // pred_fallthru
      _
    %1466 = vsyncpa [#allocation3], 1

</llo_original>
